<compile_context>
chip_gen: v7x
topology: tpu7x:2x2x1
jax: 0.10.0
libtpu: 0.0.40
codegen_flags: <defaults>
</compile_context>

<pallas_src>
import math
import functools

import jax
import jax.numpy as jnp
import numpy as np
from jax import lax
from jax.experimental import pallas as pl
from jax.experimental.pallas import tpu as pltpu

EPS = 1e-6


# ----------------------------- Pallas kernel ---------------------------------
def _fused_kernel(order_ref, nact_ref,                      # scalar-prefetch (SMEM)
                  x_ref, ids_ref, g_attn_ref, g_ffn_ref, cos_ref, sin_ref,
                  wq_ref, wqp_ref, wk_ref, wkp_ref, wv_ref, wo_ref,
                  w1_ref, w2_ref,                           # active expert's blocks
                  out_ref,                                  # (S, D) resident acc
                  hn_scr,                                   # (S, D) bf16 scratch
                  *, num_heads):
    f32, bf16 = jnp.float32, jnp.bfloat16
    b = pl.program_id(0)
    j = pl.program_id(1)

    S, D = hn_scr.shape
    hd = D // num_heads
    scale = 1.0 / math.sqrt(hd)

    def rmsnorm(v, g):
        return v * lax.rsqrt(jnp.mean(v * v, axis=-1, keepdims=True) + EPS) * g

    # ---- attention + norms: exactly once per sequence (first expert step) ----
    @pl.when(j == 0)
    def _attention():
        x = x_ref[...]                                      # (S, D) f32
        xn = rmsnorm(x, g_attn_ref[...]).astype(bf16)
        cosd = cos_ref[...]                                 # (S, D) f32
        sind = sin_ref[...]

        # RoPE folded into full-width projections (rotate-half == signed perm P).
        qf = (jnp.dot(xn, wq_ref[...], preferred_element_type=f32) * cosd +
              jnp.dot(xn, wqp_ref[...], preferred_element_type=f32) * sind)
        kf = (jnp.dot(xn, wk_ref[...], preferred_element_type=f32) * cosd +
              jnp.dot(xn, wkp_ref[...], preferred_element_type=f32) * sind)
        vf = jnp.dot(xn, wv_ref[...], preferred_element_type=f32)

        qf = (qf * scale).astype(bf16)                      # fold 1/sqrt(hd) into q
        kf = kf.astype(bf16)
        vf = vf.astype(bf16)
        wo = wo_ref[...]                                    # (D, D) bf16

        # per-sequence causal mask (tiny (S,S) per tile; no block-diag over batch)
        row = lax.broadcasted_iota(jnp.int32, (S, S), 0)
        col = lax.broadcasted_iota(jnp.int32, (S, S), 1)
        causal = col <= row

        attn = jnp.zeros((S, D), f32)
        # TODO(synk): at real head counts use lax.fori_loop over a stacked head
        # axis (bounds vreg live ranges); H=4 static unroll is fine here.
        for h in range(num_heads):
            sl = slice(h * hd, (h + 1) * hd)
            s = lax.dot_general(qf[:, sl], kf[:, sl],
                                (((1,), (1,)), ((), ())),
                                preferred_element_type=f32)          # (S, S)
            s = jnp.where(causal, s, -1e30)
            s = s - jnp.max(s, axis=-1, keepdims=True)
            p = jnp.exp(s)
            p = p * pl.reciprocal(jnp.sum(p, axis=-1, keepdims=True), approx=True)
            oh = jnp.dot(p.astype(bf16), vf[:, sl],
                         preferred_element_type=f32)                 # (S, hd)
            # accumulate through this head's Wo row-block (no lane concat)
            attn = attn + jnp.dot(oh.astype(bf16), wo[sl, :],
                                  preferred_element_type=f32)

        h_res = x + attn
        out_ref[...] = h_res                                # residual; MoE adds below
        hn_scr[...] = rmsnorm(h_res, g_ffn_ref[...]).astype(bf16)

    # ---- routed hash-MoE expert step (scalar-prefetched expert schedule) ------
    e_id = order_ref[b, j]                                  # scalar from SMEM
    @pl.when(j < nact_ref[b])                               # skip padded steps
    def _expert():
        hn = hn_scr[...]                                    # (S, D) bf16
        h1 = jnp.dot(hn, w1_ref[...], preferred_element_type=f32)   # (S, Hf)
        h1 = h1 * jax.nn.sigmoid(h1)                        # SiLU (f32, EUP)
        sel = ids_ref[...] == e_id                          # (S, 1) token routing
        h1 = jnp.where(sel, h1, 0.0).astype(bf16)
        out_ref[...] += jnp.dot(h1, w2_ref[...], preferred_element_type=f32)


# ------------------------------- wrapper --------------------------------------
def moe_hash_block(x, mapped_tokens, params, *, num_heads, num_experts):
    B, S, D = x.shape
    hd = D // num_heads
    half = hd // 2
    E = num_experts
    Hf = params["w1"].shape[-1]
    f32, bf16 = jnp.float32, jnp.bfloat16

    # rotate-half as a signed permutation, block-diagonal over heads, folded into Wq/Wk
    P = np.zeros((hd, hd), np.float32)
    P[half:, :half] = -np.eye(half, dtype=np.float32)
    P[:half, half:] = np.eye(half, dtype=np.float32)
    P_full = jnp.asarray(np.kron(np.eye(num_heads, dtype=np.float32), P))  # (D, D)

    wq, wk = params["wq"], params["wk"]
    wqp = wq @ P_full
    wkp = wk @ P_full

    cosd = jnp.tile(params["cos"], (1, num_heads)).astype(f32)   # (S, D)
    sind = jnp.tile(params["sin"], (1, num_heads)).astype(f32)

    ids = mapped_tokens.astype(jnp.int32)                        # (B, S)
    ids3 = ids[..., None]                                        # (B, S, 1)

    # per-sequence expert schedule for scalar-prefetch routing:
    #   order[b, j] = j-th distinct expert used by sequence b, padded by repeating
    #   the last active expert (padded steps keep the resident block -> no DMA),
    #   nact[b]     = number of distinct experts actually used by sequence b.
    e_range = jnp.arange(E, dtype=jnp.int32)
    present = (ids[:, :, None] == e_range[None, None, :]).any(axis=1)       # (B, E)
    nact = present.sum(axis=-1).astype(jnp.int32)                           # (B,)
    keys = jnp.where(present, e_range[None, :], E)
    order_sorted = jnp.sort(keys, axis=-1)
    last_active = jnp.take_along_axis(order_sorted, (nact - 1)[:, None], axis=-1)
    order = jnp.minimum(order_sorted, last_active).astype(jnp.int32)        # (B, E)

    inputs = [
        x.astype(f32), ids3,
        params["g_attn"].astype(f32), params["g_ffn"].astype(f32),
        cosd, sind,
        wq.astype(bf16), wqp.astype(bf16),
        wk.astype(bf16), wkp.astype(bf16),
        params["wv"].astype(bf16), params["wo"].astype(bf16),
        params["w1"].astype(bf16), params["w2"].astype(bf16),
    ]

    in_specs = [
        pl.BlockSpec((None, S, D), lambda b, j, o, n: (b, 0, 0)),        # x
        pl.BlockSpec((None, S, 1), lambda b, j, o, n: (b, 0, 0)),        # token ids
        pl.BlockSpec((1, D), lambda b, j, o, n: (0, 0)),                 # g_attn
        pl.BlockSpec((1, D), lambda b, j, o, n: (0, 0)),                 # g_ffn
        pl.BlockSpec((S, D), lambda b, j, o, n: (0, 0)),                 # cos (tiled)
        pl.BlockSpec((S, D), lambda b, j, o, n: (0, 0)),                 # sin (tiled)
        pl.BlockSpec((D, D), lambda b, j, o, n: (0, 0)),                 # Wq
        pl.BlockSpec((D, D), lambda b, j, o, n: (0, 0)),                 # Wq @ P
        pl.BlockSpec((D, D), lambda b, j, o, n: (0, 0)),                 # Wk
        pl.BlockSpec((D, D), lambda b, j, o, n: (0, 0)),                 # Wk @ P
        pl.BlockSpec((D, D), lambda b, j, o, n: (0, 0)),                 # Wv
        pl.BlockSpec((D, D), lambda b, j, o, n: (0, 0)),                 # Wo
        # routed expert weights: data-dependent block index from prefetched schedule
        pl.BlockSpec((None, D, Hf), lambda b, j, o, n: (o[b, j], 0, 0)), # W1[e]
        pl.BlockSpec((None, Hf, D), lambda b, j, o, n: (o[b, j], 0, 0)), # W2[e]
    ]
    out_spec = pl.BlockSpec((None, S, D), lambda b, j, o, n: (b, 0, 0))  # resident acc

    # advisory cost estimate (worst case: all E experts active)
    flops = int(B * (5 * 2 * S * D * D                       # q, qP, k, kP, v proj
                     + num_heads * 2 * 2 * S * S * hd        # QK^T + PV
                     + num_heads * 2 * S * hd * D            # per-head Wo
                     + E * 2 * 2 * S * D * Hf))              # routed MoE W1+W2
    transc = int(B * (num_heads * S * S + E * S * Hf))
    bytes_acc = int(sum(int(np.prod(a.shape)) * a.dtype.itemsize for a in inputs)
                    + B * S * D * 4 + order.size * 4 + nact.size * 4)

    kernel = functools.partial(_fused_kernel, num_heads=num_heads)

    out = pl.pallas_call(
        kernel,
        out_shape=jax.ShapeDtypeStruct((B, S, D), f32),
        grid_spec=pltpu.PrefetchScalarGridSpec(
            num_scalar_prefetch=2,            # (order, nact) -> SMEM
            grid=(B, E),                      # batch parallel, experts arbitrary
            in_specs=in_specs,
            out_specs=out_spec,
            scratch_shapes=[pltpu.VMEM((S, D), bf16)],   # ffn_norm(h) reused per expert
        ),
        compiler_params=pltpu.CompilerParams(
            dimension_semantics=("parallel", "arbitrary"),
            vmem_limit_bytes=32 * 1024 * 1024,
        ),
        cost_estimate=pl.CostEstimate(flops=flops, transcendentals=transc,
                                      bytes_accessed=bytes_acc),
    )(order, nact, *inputs)

    return out


# --------------------------- pure-JAX reference -------------------------------
def reference(x, mapped_tokens, params, *, num_heads, num_experts):
    def per_example(xb, mb):
        S, D = xb.shape
        hd = D // num_heads
        scale = 1.0 / math.sqrt(hd)

        def rmsnorm(v, g):
            return v * lax.rsqrt(jnp.mean(v * v, -1, keepdims=True) + EPS) * g

        def rotate_half(v):
            return jnp.concatenate([-v[:, hd // 2:], v[:, :hd // 2]], axis=-1)

        xn = rmsnorm(xb, params["g_attn"])
        q = xn @ params["wq"]
        k = xn @ params["wk"]
        v = xn @ params["wv"]
        cos, sin = params["cos"], params["sin"]
        causal = jnp.tril(jnp.ones((S, S), bool))
        outs = []
        for h in range(num_heads):
            sl = slice(h * hd, (h + 1) * hd)
            qh, kh, vh = q[:, sl], k[:, sl], v[:, sl]
            qh = qh * cos + rotate_half(qh) * sin
            kh = kh * cos + rotate_half(kh) * sin
            s_ = (qh @ kh.T) * scale
            s_ = jnp.where(causal, s_, -1e30)
            p = jax.nn.softmax(s_, axis=-1)
            outs.append(p @ vh)
        attn = jnp.concatenate(outs, -1) @ params["wo"]
        h_res = xb + attn
        hn = rmsnorm(h_res, params["g_ffn"])
        y = jnp.zeros_like(hn)
        for e in range(num_experts):
            m = (mb[:, None] == e).astype(jnp.float32)
            h1 = hn @ params["w1"][e]
            h1 = h1 * jax.nn.sigmoid(h1)
            y = y + m * (h1 @ params["w2"][e])
        return h_res + y

    return jax.vmap(per_example)(x, mapped_tokens)


# ---------------------------------- main ---------------------------------------
if __name__ == "__main__":
    # config (small, consistent with the module)
    B, S, D = 2, 8, 32          # batch, cntx, dim
    num_heads = 4               # head_dim = 8
    num_experts = 4
    Hf = 4 * D                  # expert FFN hidden
    hd = D // num_heads

    key = jax.random.PRNGKey(0)
    ks = jax.random.split(key, 10)
    init = lambda k, shape: (0.02 * jax.random.normal(k, shape)).astype(jnp.float32)

    # RoPE tables (rotate-half convention)
    pos = jnp.arange(S, dtype=jnp.float32)
    inv_freq = 1.0 / (10000.0 ** (jnp.arange(0, hd, 2, dtype=jnp.float32) / hd))
    freqs = pos[:, None] * inv_freq[None, :]                      # (S, hd/2)
    cos = jnp.concatenate([jnp.cos(freqs), jnp.cos(freqs)], -1)   # (S, hd)
    sin = jnp.concatenate([jnp.sin(freqs), jnp.sin(freqs)], -1)   # (S, hd)

    params = {
        "g_attn": jnp.ones((1, D), jnp.float32),
        "g_ffn": jnp.ones((1, D), jnp.float32),
        "wq": init(ks[0], (D, D)),
        "wk": init(ks[1], (D, D)),
        "wv": init(ks[2], (D, D)),
        "wo": init(ks[3], (D, D)),
        "w1": init(ks[4], (num_experts, D, Hf)),
        "w2": init(ks[5], (num_experts, Hf, D)),
        "cos": cos,
        "sin": sin,
    }

    x = jax.random.normal(ks[6], (B, S, D), jnp.float32)
    mapped_tokens = jax.random.randint(ks[7], (B, S), 0, num_experts, jnp.int32)

    out = moe_hash_block(x, mapped_tokens, params,
                         num_heads=num_heads, num_experts=num_experts)
    out = jax.block_until_ready(out)

    ref = reference(x, mapped_tokens, params,
                    num_heads=num_heads, num_experts=num_experts)
    np.testing.assert_allclose(np.asarray(out), np.asarray(ref),
                               rtol=1e-2, atol=1e-2)

    print("KERNEL_OK")
</pallas_src>

<mosaic_0001>
module attributes {stable_mosaic.version = 11 : i64} {
  func.func @_fused_kernel(%arg0: i32, %arg1: i32, %arg2: memref<2x4xi32, #tpu.memory_space<smem>>, %arg3: memref<2xi32, #tpu.memory_space<smem>>, %arg4: memref<1x8x32xf32, #tpu.memory_space<vmem>>, %arg5: memref<1x8x1xi32, #tpu.memory_space<vmem>>, %arg6: memref<1x32xf32, #tpu.memory_space<vmem>>, %arg7: memref<1x32xf32, #tpu.memory_space<vmem>>, %arg8: memref<8x32xf32, #tpu.memory_space<vmem>>, %arg9: memref<8x32xf32, #tpu.memory_space<vmem>>, %arg10: memref<32x32xbf16, #tpu.memory_space<vmem>>, %arg11: memref<32x32xbf16, #tpu.memory_space<vmem>>, %arg12: memref<32x32xbf16, #tpu.memory_space<vmem>>, %arg13: memref<32x32xbf16, #tpu.memory_space<vmem>>, %arg14: memref<32x32xbf16, #tpu.memory_space<vmem>>, %arg15: memref<32x32xbf16, #tpu.memory_space<vmem>>, %arg16: memref<1x32x128xbf16, #tpu.memory_space<vmem>>, %arg17: memref<1x128x32xbf16, #tpu.memory_space<vmem>>, %arg18: memref<1x8x32xf32, #tpu.memory_space<vmem>>, %arg19: memref<8x32xbf16, #tpu.memory_space<vmem>>) attributes {dimension_semantics = [#tpu.dimension_semantics<parallel>, #tpu.dimension_semantics<arbitrary>], iteration_bounds = array<i64: 2, 4>, scalar_prefetch = 2 : i64, scratch_operands = 1 : i64, tpu.core_type = #tpu.core_type<tc>, window_params = [{transform_indices = @transform_0, window_bounds = array<i64: 1, 8, 32>}, {transform_indices = @transform_1, window_bounds = array<i64: 1, 8, 1>}, {pipeline_mode = #tpu.pipeline_mode<synchronous>, transform_indices = @transform_2, window_bounds = array<i64: 1, 32>}, {pipeline_mode = #tpu.pipeline_mode<synchronous>, transform_indices = @transform_3, window_bounds = array<i64: 1, 32>}, {pipeline_mode = #tpu.pipeline_mode<synchronous>, transform_indices = @transform_4, window_bounds = array<i64: 8, 32>}, {pipeline_mode = #tpu.pipeline_mode<synchronous>, transform_indices = @transform_5, window_bounds = array<i64: 8, 32>}, {pipeline_mode = #tpu.pipeline_mode<synchronous>, transform_indices = @transform_6, window_bounds = array<i64: 32, 32>}, {pipeline_mode = #tpu.pipeline_mode<synchronous>, transform_indices = @transform_7, window_bounds = array<i64: 32, 32>}, {pipeline_mode = #tpu.pipeline_mode<synchronous>, transform_indices = @transform_8, window_bounds = array<i64: 32, 32>}, {pipeline_mode = #tpu.pipeline_mode<synchronous>, transform_indices = @transform_9, window_bounds = array<i64: 32, 32>}, {pipeline_mode = #tpu.pipeline_mode<synchronous>, transform_indices = @transform_10, window_bounds = array<i64: 32, 32>}, {pipeline_mode = #tpu.pipeline_mode<synchronous>, transform_indices = @transform_11, window_bounds = array<i64: 32, 32>}, {transform_indices = @transform_12, window_bounds = array<i64: 1, 32, 128>}, {transform_indices = @transform_13, window_bounds = array<i64: 1, 128, 32>}, {transform_indices = @transform_14, window_bounds = array<i64: 1, 8, 32>}]} {
    %c0_i32 = arith.constant 0 : i32
    %0 = arith.cmpi eq, %arg1, %c0_i32 : i32
    %1 = arith.extui %0 : i1 to i32
    %c0_i32_0 = arith.constant 0 : i32
    %2 = arith.cmpi ne, %1, %c0_i32_0 : i32
    scf.if %2 {
      %c0 = arith.constant 0 : index
      %c0_2 = arith.constant 0 : index
      %c0_3 = arith.constant 0 : index
      %11 = vector.load %arg4[%c0, %c0_2, %c0_3] : memref<1x8x32xf32, #tpu.memory_space<vmem>>, vector<1x8x32xf32>
      %12 = vector.shape_cast %11 : vector<1x8x32xf32> to vector<8x32xf32>
      %c0_4 = arith.constant 0 : index
      %c0_5 = arith.constant 0 : index
      %13 = vector.load %arg6[%c0_4, %c0_5] : memref<1x32xf32, #tpu.memory_space<vmem>>, vector<1x32xf32>
      %14 = arith.mulf %12, %12 : vector<8x32xf32>
      %cst = arith.constant dense<0.000000e+00> : vector<8xf32>
      %15 = vector.multi_reduction <add>, %14, %cst [1] : vector<8x32xf32> to vector<8xf32>
      %16 = vector.shape_cast %15 : vector<8xf32> to vector<8x1xf32>
      %cst_6 = arith.constant 3.200000e+01 : f32
      %17 = vector.broadcast %cst_6 : f32 to vector<8x1xf32>
      %18 = arith.divf %16, %17 : vector<8x1xf32>
      %cst_7 = arith.constant 9.99999997E-7 : f32
      %19 = vector.broadcast %cst_7 : f32 to vector<8x1xf32>
      %20 = arith.addf %18, %19 : vector<8x1xf32>
      %21 = math.rsqrt %20 : vector<8x1xf32>
      %22 = vector.broadcast %21 : vector<8x1xf32> to vector<8x32xf32>
      %23 = arith.mulf %12, %22 : vector<8x32xf32>
      %24 = vector.broadcast %13 : vector<1x32xf32> to vector<8x32xf32>
      %25 = arith.mulf %23, %24 : vector<8x32xf32>
      %26 = arith.truncf %25 : vector<8x32xf32> to vector<8x32xbf16>
      %c0_8 = arith.constant 0 : index
      %c0_9 = arith.constant 0 : index
      %27 = vector.load %arg8[%c0_8, %c0_9] : memref<8x32xf32, #tpu.memory_space<vmem>>, vector<8x32xf32>
      %c0_10 = arith.constant 0 : index
      %c0_11 = arith.constant 0 : index
      %28 = vector.load %arg9[%c0_10, %c0_11] : memref<8x32xf32, #tpu.memory_space<vmem>>, vector<8x32xf32>
      %c0_12 = arith.constant 0 : index
      %c0_13 = arith.constant 0 : index
      %29 = vector.load %arg10[%c0_12, %c0_13] : memref<32x32xbf16, #tpu.memory_space<vmem>>, vector<32x32xbf16>
      %cst_14 = arith.constant dense<0.000000e+00> : vector<8x32xf32>
      %30 = tpu.matmul %26, %29, %cst_14 {dimension_numbers = #tpu.dot_dimension_numbers<[1], [0], [0], [1], [0, 0, 1, 1], [], []>} : vector<8x32xbf16>, vector<32x32xbf16>, vector<8x32xf32> -> vector<8x32xf32>
      %31 = arith.mulf %30, %27 : vector<8x32xf32>
      %c0_15 = arith.constant 0 : index
      %c0_16 = arith.constant 0 : index
      %32 = vector.load %arg11[%c0_15, %c0_16] : memref<32x32xbf16, #tpu.memory_space<vmem>>, vector<32x32xbf16>
      %cst_17 = arith.constant dense<0.000000e+00> : vector<8x32xf32>
      %33 = tpu.matmul %26, %32, %cst_17 {dimension_numbers = #tpu.dot_dimension_numbers<[1], [0], [0], [1], [0, 0, 1, 1], [], []>} : vector<8x32xbf16>, vector<32x32xbf16>, vector<8x32xf32> -> vector<8x32xf32>
      %34 = arith.mulf %33, %28 : vector<8x32xf32>
      %35 = arith.addf %31, %34 : vector<8x32xf32>
      %c0_18 = arith.constant 0 : index
      %c0_19 = arith.constant 0 : index
      %36 = vector.load %arg12[%c0_18, %c0_19] : memref<32x32xbf16, #tpu.memory_space<vmem>>, vector<32x32xbf16>
      %cst_20 = arith.constant dense<0.000000e+00> : vector<8x32xf32>
      %37 = tpu.matmul %26, %36, %cst_20 {dimension_numbers = #tpu.dot_dimension_numbers<[1], [0], [0], [1], [0, 0, 1, 1], [], []>} : vector<8x32xbf16>, vector<32x32xbf16>, vector<8x32xf32> -> vector<8x32xf32>
      %38 = arith.mulf %37, %27 : vector<8x32xf32>
      %c0_21 = arith.constant 0 : index
      %c0_22 = arith.constant 0 : index
      %39 = vector.load %arg13[%c0_21, %c0_22] : memref<32x32xbf16, #tpu.memory_space<vmem>>, vector<32x32xbf16>
      %cst_23 = arith.constant dense<0.000000e+00> : vector<8x32xf32>
      %40 = tpu.matmul %26, %39, %cst_23 {dimension_numbers = #tpu.dot_dimension_numbers<[1], [0], [0], [1], [0, 0, 1, 1], [], []>} : vector<8x32xbf16>, vector<32x32xbf16>, vector<8x32xf32> -> vector<8x32xf32>
      %41 = arith.mulf %40, %28 : vector<8x32xf32>
      %42 = arith.addf %38, %41 : vector<8x32xf32>
      %c0_24 = arith.constant 0 : index
      %c0_25 = arith.constant 0 : index
      %43 = vector.load %arg14[%c0_24, %c0_25] : memref<32x32xbf16, #tpu.memory_space<vmem>>, vector<32x32xbf16>
      %cst_26 = arith.constant dense<0.000000e+00> : vector<8x32xf32>
      %44 = tpu.matmul %26, %43, %cst_26 {dimension_numbers = #tpu.dot_dimension_numbers<[1], [0], [0], [1], [0, 0, 1, 1], [], []>} : vector<8x32xbf16>, vector<32x32xbf16>, vector<8x32xf32> -> vector<8x32xf32>
      %cst_27 = arith.constant 0.353553385 : f32
      %45 = vector.broadcast %cst_27 : f32 to vector<8x32xf32>
      %46 = arith.mulf %35, %45 : vector<8x32xf32>
      %47 = arith.truncf %46 : vector<8x32xf32> to vector<8x32xbf16>
      %48 = arith.truncf %42 : vector<8x32xf32> to vector<8x32xbf16>
      %49 = arith.truncf %44 : vector<8x32xf32> to vector<8x32xbf16>
      %c0_28 = arith.constant 0 : index
      %c0_29 = arith.constant 0 : index
      %50 = vector.load %arg15[%c0_28, %c0_29] : memref<32x32xbf16, #tpu.memory_space<vmem>>, vector<32x32xbf16>
      %51 = tpu.iota {dimensions = array<i32: 0>} : vector<8x8xi32>
      %52 = tpu.iota {dimensions = array<i32: 1>} : vector<8x8xi32>
      %53 = arith.cmpi sle, %52, %51 : vector<8x8xi32>
      %cst_30 = arith.constant 0.000000e+00 : f32
      %54 = vector.broadcast %cst_30 : f32 to vector<8x32xf32>
      %55 = vector.extract_strided_slice %47 {offsets = [0, 0], sizes = [8, 8], strides = [1, 1]} : vector<8x32xbf16> to vector<8x8xbf16>
      %56 = vector.extract_strided_slice %48 {offsets = [0, 0], sizes = [8, 8], strides = [1, 1]} : vector<8x32xbf16> to vector<8x8xbf16>
      %cst_31 = arith.constant dense<0.000000e+00> : vector<8x8xf32>
      %57 = tpu.matmul %55, %56, %cst_31 {dimension_numbers = #tpu.dot_dimension_numbers<[1], [1], [0], [0], [0, 0, 1, 0], [], []>} : vector<8x8xbf16>, vector<8x8xbf16>, vector<8x8xf32> -> vector<8x8xf32>
      %cst_32 = arith.constant -1.000000e+30 : f32
      %58 = vector.broadcast %cst_32 : f32 to vector<8x8xf32>
      %59 = arith.select %53, %57, %58 : vector<8x8xi1>, vector<8x8xf32>
      %cst_33 = arith.constant dense<0xFF800000> : vector<8xf32>
      %60 = vector.multi_reduction <maximumf>, %59, %cst_33 [1] : vector<8x8xf32> to vector<8xf32>
      %61 = vector.shape_cast %60 : vector<8xf32> to vector<8x1xf32>
      %62 = vector.broadcast %61 : vector<8x1xf32> to vector<8x8xf32>
      %63 = arith.subf %59, %62 : vector<8x8xf32>
      %64 = math.exp %63 : vector<8x8xf32>
      %cst_34 = arith.constant dense<0.000000e+00> : vector<8xf32>
      %65 = vector.multi_reduction <add>, %64, %cst_34 [1] : vector<8x8xf32> to vector<8xf32>
      %66 = vector.shape_cast %65 : vector<8xf32> to vector<8x1xf32>
      %67 = tpu.reciprocal %66 {approx = true} : vector<8x1xf32> -> vector<8x1xf32>
      %68 = vector.broadcast %67 : vector<8x1xf32> to vector<8x8xf32>
      %69 = arith.mulf %64, %68 : vector<8x8xf32>
      %70 = arith.truncf %69 : vector<8x8xf32> to vector<8x8xbf16>
      %71 = vector.extract_strided_slice %49 {offsets = [0, 0], sizes = [8, 8], strides = [1, 1]} : vector<8x32xbf16> to vector<8x8xbf16>
      %cst_35 = arith.constant dense<0.000000e+00> : vector<8x8xf32>
      %72 = tpu.matmul %70, %71, %cst_35 {dimension_numbers = #tpu.dot_dimension_numbers<[1], [0], [0], [1], [0, 0, 1, 1], [], []>} : vector<8x8xbf16>, vector<8x8xbf16>, vector<8x8xf32> -> vector<8x8xf32>
      %73 = arith.truncf %72 : vector<8x8xf32> to vector<8x8xbf16>
      %74 = vector.extract_strided_slice %50 {offsets = [0, 0], sizes = [8, 32], strides = [1, 1]} : vector<32x32xbf16> to vector<8x32xbf16>
      %cst_36 = arith.constant dense<0.000000e+00> : vector<8x32xf32>
      %75 = tpu.matmul %73, %74, %cst_36 {dimension_numbers = #tpu.dot_dimension_numbers<[1], [0], [0], [1], [0, 0, 1, 1], [], []>} : vector<8x8xbf16>, vector<8x32xbf16>, vector<8x32xf32> -> vector<8x32xf32>
      %76 = arith.addf %54, %75 : vector<8x32xf32>
      %77 = vector.extract_strided_slice %47 {offsets = [0, 8], sizes = [8, 8], strides = [1, 1]} : vector<8x32xbf16> to vector<8x8xbf16>
      %78 = vector.extract_strided_slice %48 {offsets = [0, 8], sizes = [8, 8], strides = [1, 1]} : vector<8x32xbf16> to vector<8x8xbf16>
      %cst_37 = arith.constant dense<0.000000e+00> : vector<8x8xf32>
      %79 = tpu.matmul %77, %78, %cst_37 {dimension_numbers = #tpu.dot_dimension_numbers<[1], [1], [0], [0], [0, 0, 1, 0], [], []>} : vector<8x8xbf16>, vector<8x8xbf16>, vector<8x8xf32> -> vector<8x8xf32>
      %cst_38 = arith.constant -1.000000e+30 : f32
      %80 = vector.broadcast %cst_38 : f32 to vector<8x8xf32>
      %81 = arith.select %53, %79, %80 : vector<8x8xi1>, vector<8x8xf32>
      %cst_39 = arith.constant dense<0xFF800000> : vector<8xf32>
      %82 = vector.multi_reduction <maximumf>, %81, %cst_39 [1] : vector<8x8xf32> to vector<8xf32>
      %83 = vector.shape_cast %82 : vector<8xf32> to vector<8x1xf32>
      %84 = vector.broadcast %83 : vector<8x1xf32> to vector<8x8xf32>
      %85 = arith.subf %81, %84 : vector<8x8xf32>
      %86 = math.exp %85 : vector<8x8xf32>
      %cst_40 = arith.constant dense<0.000000e+00> : vector<8xf32>
      %87 = vector.multi_reduction <add>, %86, %cst_40 [1] : vector<8x8xf32> to vector<8xf32>
      %88 = vector.shape_cast %87 : vector<8xf32> to vector<8x1xf32>
      %89 = tpu.reciprocal %88 {approx = true} : vector<8x1xf32> -> vector<8x1xf32>
      %90 = vector.broadcast %89 : vector<8x1xf32> to vector<8x8xf32>
      %91 = arith.mulf %86, %90 : vector<8x8xf32>
      %92 = arith.truncf %91 : vector<8x8xf32> to vector<8x8xbf16>
      %93 = vector.extract_strided_slice %49 {offsets = [0, 8], sizes = [8, 8], strides = [1, 1]} : vector<8x32xbf16> to vector<8x8xbf16>
      %cst_41 = arith.constant dense<0.000000e+00> : vector<8x8xf32>
      %94 = tpu.matmul %92, %93, %cst_41 {dimension_numbers = #tpu.dot_dimension_numbers<[1], [0], [0], [1], [0, 0, 1, 1], [], []>} : vector<8x8xbf16>, vector<8x8xbf16>, vector<8x8xf32> -> vector<8x8xf32>
      %95 = arith.truncf %94 : vector<8x8xf32> to vector<8x8xbf16>
      %96 = vector.extract_strided_slice %50 {offsets = [8, 0], sizes = [8, 32], strides = [1, 1]} : vector<32x32xbf16> to vector<8x32xbf16>
      %cst_42 = arith.constant dense<0.000000e+00> : vector<8x32xf32>
      %97 = tpu.matmul %95, %96, %cst_42 {dimension_numbers = #tpu.dot_dimension_numbers<[1], [0], [0], [1], [0, 0, 1, 1], [], []>} : vector<8x8xbf16>, vector<8x32xbf16>, vector<8x32xf32> -> vector<8x32xf32>
      %98 = arith.addf %76, %97 : vector<8x32xf32>
      %99 = vector.extract_strided_slice %47 {offsets = [0, 16], sizes = [8, 8], strides = [1, 1]} : vector<8x32xbf16> to vector<8x8xbf16>
      %100 = vector.extract_strided_slice %48 {offsets = [0, 16], sizes = [8, 8], strides = [1, 1]} : vector<8x32xbf16> to vector<8x8xbf16>
      %cst_43 = arith.constant dense<0.000000e+00> : vector<8x8xf32>
      %101 = tpu.matmul %99, %100, %cst_43 {dimension_numbers = #tpu.dot_dimension_numbers<[1], [1], [0], [0], [0, 0, 1, 0], [], []>} : vector<8x8xbf16>, vector<8x8xbf16>, vector<8x8xf32> -> vector<8x8xf32>
      %cst_44 = arith.constant -1.000000e+30 : f32
      %102 = vector.broadcast %cst_44 : f32 to vector<8x8xf32>
      %103 = arith.select %53, %101, %102 : vector<8x8xi1>, vector<8x8xf32>
      %cst_45 = arith.constant dense<0xFF800000> : vector<8xf32>
      %104 = vector.multi_reduction <maximumf>, %103, %cst_45 [1] : vector<8x8xf32> to vector<8xf32>
      %105 = vector.shape_cast %104 : vector<8xf32> to vector<8x1xf32>
      %106 = vector.broadcast %105 : vector<8x1xf32> to vector<8x8xf32>
      %107 = arith.subf %103, %106 : vector<8x8xf32>
      %108 = math.exp %107 : vector<8x8xf32>
      %cst_46 = arith.constant dense<0.000000e+00> : vector<8xf32>
      %109 = vector.multi_reduction <add>, %108, %cst_46 [1] : vector<8x8xf32> to vector<8xf32>
      %110 = vector.shape_cast %109 : vector<8xf32> to vector<8x1xf32>
      %111 = tpu.reciprocal %110 {approx = true} : vector<8x1xf32> -> vector<8x1xf32>
      %112 = vector.broadcast %111 : vector<8x1xf32> to vector<8x8xf32>
      %113 = arith.mulf %108, %112 : vector<8x8xf32>
      %114 = arith.truncf %113 : vector<8x8xf32> to vector<8x8xbf16>
      %115 = vector.extract_strided_slice %49 {offsets = [0, 16], sizes = [8, 8], strides = [1, 1]} : vector<8x32xbf16> to vector<8x8xbf16>
      %cst_47 = arith.constant dense<0.000000e+00> : vector<8x8xf32>
      %116 = tpu.matmul %114, %115, %cst_47 {dimension_numbers = #tpu.dot_dimension_numbers<[1], [0], [0], [1], [0, 0, 1, 1], [], []>} : vector<8x8xbf16>, vector<8x8xbf16>, vector<8x8xf32> -> vector<8x8xf32>
      %117 = arith.truncf %116 : vector<8x8xf32> to vector<8x8xbf16>
      %118 = vector.extract_strided_slice %50 {offsets = [16, 0], sizes = [8, 32], strides = [1, 1]} : vector<32x32xbf16> to vector<8x32xbf16>
      %cst_48 = arith.constant dense<0.000000e+00> : vector<8x32xf32>
      %119 = tpu.matmul %117, %118, %cst_48 {dimension_numbers = #tpu.dot_dimension_numbers<[1], [0], [0], [1], [0, 0, 1, 1], [], []>} : vector<8x8xbf16>, vector<8x32xbf16>, vector<8x32xf32> -> vector<8x32xf32>
      %120 = arith.addf %98, %119 : vector<8x32xf32>
      %121 = vector.extract_strided_slice %47 {offsets = [0, 24], sizes = [8, 8], strides = [1, 1]} : vector<8x32xbf16> to vector<8x8xbf16>
      %122 = vector.extract_strided_slice %48 {offsets = [0, 24], sizes = [8, 8], strides = [1, 1]} : vector<8x32xbf16> to vector<8x8xbf16>
      %cst_49 = arith.constant dense<0.000000e+00> : vector<8x8xf32>
      %123 = tpu.matmul %121, %122, %cst_49 {dimension_numbers = #tpu.dot_dimension_numbers<[1], [1], [0], [0], [0, 0, 1, 0], [], []>} : vector<8x8xbf16>, vector<8x8xbf16>, vector<8x8xf32> -> vector<8x8xf32>
      %cst_50 = arith.constant -1.000000e+30 : f32
      %124 = vector.broadcast %cst_50 : f32 to vector<8x8xf32>
      %125 = arith.select %53, %123, %124 : vector<8x8xi1>, vector<8x8xf32>
      %cst_51 = arith.constant dense<0xFF800000> : vector<8xf32>
      %126 = vector.multi_reduction <maximumf>, %125, %cst_51 [1] : vector<8x8xf32> to vector<8xf32>
      %127 = vector.shape_cast %126 : vector<8xf32> to vector<8x1xf32>
      %128 = vector.broadcast %127 : vector<8x1xf32> to vector<8x8xf32>
      %129 = arith.subf %125, %128 : vector<8x8xf32>
      %130 = math.exp %129 : vector<8x8xf32>
      %cst_52 = arith.constant dense<0.000000e+00> : vector<8xf32>
      %131 = vector.multi_reduction <add>, %130, %cst_52 [1] : vector<8x8xf32> to vector<8xf32>
      %132 = vector.shape_cast %131 : vector<8xf32> to vector<8x1xf32>
      %133 = tpu.reciprocal %132 {approx = true} : vector<8x1xf32> -> vector<8x1xf32>
      %134 = vector.broadcast %133 : vector<8x1xf32> to vector<8x8xf32>
      %135 = arith.mulf %130, %134 : vector<8x8xf32>
      %136 = arith.truncf %135 : vector<8x8xf32> to vector<8x8xbf16>
      %137 = vector.extract_strided_slice %49 {offsets = [0, 24], sizes = [8, 8], strides = [1, 1]} : vector<8x32xbf16> to vector<8x8xbf16>
      %cst_53 = arith.constant dense<0.000000e+00> : vector<8x8xf32>
      %138 = tpu.matmul %136, %137, %cst_53 {dimension_numbers = #tpu.dot_dimension_numbers<[1], [0], [0], [1], [0, 0, 1, 1], [], []>} : vector<8x8xbf16>, vector<8x8xbf16>, vector<8x8xf32> -> vector<8x8xf32>
      %139 = arith.truncf %138 : vector<8x8xf32> to vector<8x8xbf16>
      %140 = vector.extract_strided_slice %50 {offsets = [24, 0], sizes = [8, 32], strides = [1, 1]} : vector<32x32xbf16> to vector<8x32xbf16>
      %cst_54 = arith.constant dense<0.000000e+00> : vector<8x32xf32>
      %141 = tpu.matmul %139, %140, %cst_54 {dimension_numbers = #tpu.dot_dimension_numbers<[1], [0], [0], [1], [0, 0, 1, 1], [], []>} : vector<8x8xbf16>, vector<8x32xbf16>, vector<8x32xf32> -> vector<8x32xf32>
      %142 = arith.addf %120, %141 : vector<8x32xf32>
      %143 = arith.addf %12, %142 : vector<8x32xf32>
      %c0_55 = arith.constant 0 : index
      %c0_56 = arith.constant 0 : index
      %c0_57 = arith.constant 0 : index
      %144 = vector.load %arg18[%c0_55, %c0_56, %c0_57] : memref<1x8x32xf32, #tpu.memory_space<vmem>>, vector<1x8x32xf32>
      %145 = vector.shape_cast %144 : vector<1x8x32xf32> to vector<8x32xf32>
      %146 = vector.shape_cast %143 : vector<8x32xf32> to vector<1x8x32xf32>
      tpu.vector_store %arg18[%c0_55, %c0_56, %c0_57], %146 {strides = array<i32>} : memref<1x8x32xf32, #tpu.memory_space<vmem>>, vector<1x8x32xf32>,
      %c0_58 = arith.constant 0 : index
      %c0_59 = arith.constant 0 : index
      %147 = vector.load %arg7[%c0_58, %c0_59] : memref<1x32xf32, #tpu.memory_space<vmem>>, vector<1x32xf32>
      %148 = arith.mulf %143, %143 : vector<8x32xf32>
      %cst_60 = arith.constant dense<0.000000e+00> : vector<8xf32>
      %149 = vector.multi_reduction <add>, %148, %cst_60 [1] : vector<8x32xf32> to vector<8xf32>
      %150 = vector.shape_cast %149 : vector<8xf32> to vector<8x1xf32>
      %cst_61 = arith.constant 3.200000e+01 : f32
      %151 = vector.broadcast %cst_61 : f32 to vector<8x1xf32>
      %152 = arith.divf %150, %151 : vector<8x1xf32>
      %cst_62 = arith.constant 9.99999997E-7 : f32
      %153 = vector.broadcast %cst_62 : f32 to vector<8x1xf32>
      %154 = arith.addf %152, %153 : vector<8x1xf32>
      %155 = math.rsqrt %154 : vector<8x1xf32>
      %156 = vector.broadcast %155 : vector<8x1xf32> to vector<8x32xf32>
      %157 = arith.mulf %143, %156 : vector<8x32xf32>
      %158 = vector.broadcast %147 : vector<1x32xf32> to vector<8x32xf32>
      %159 = arith.mulf %157, %158 : vector<8x32xf32>
      %160 = arith.truncf %159 : vector<8x32xf32> to vector<8x32xbf16>
      %c0_63 = arith.constant 0 : index
      %c0_64 = arith.constant 0 : index
      %161 = vector.load %arg19[%c0_63, %c0_64] : memref<8x32xbf16, #tpu.memory_space<vmem>>, vector<8x32xbf16>
      tpu.vector_store %arg19[%c0_63, %c0_64], %160 {strides = array<i32>} : memref<8x32xbf16, #tpu.memory_space<vmem>>, vector<8x32xbf16>,
    } else {
    }
    %3 = arith.index_cast %arg0 : i32 to index
    %4 = arith.index_cast %arg1 : i32 to index
    %5 = memref.load %arg2[%3, %4] : memref<2x4xi32, #tpu.memory_space<smem>>
    %6 = arith.index_cast %arg0 : i32 to index
    %7 = memref.load %arg3[%6] : memref<2xi32, #tpu.memory_space<smem>>
    %8 = arith.cmpi slt, %arg1, %7 : i32
    %9 = arith.extui %8 : i1 to i32
    %c0_i32_1 = arith.constant 0 : i32
    %10 = arith.cmpi ne, %9, %c0_i32_1 : i32
    scf.if %10 {
      %c0 = arith.constant 0 : index
      %c0_2 = arith.constant 0 : index
      %11 = vector.load %arg19[%c0, %c0_2] : memref<8x32xbf16, #tpu.memory_space<vmem>>, vector<8x32xbf16>
      %c0_3 = arith.constant 0 : index
      %c0_4 = arith.constant 0 : index
      %c0_5 = arith.constant 0 : index
      %12 = vector.load %arg16[%c0_3, %c0_4, %c0_5] : memref<1x32x128xbf16, #tpu.memory_space<vmem>>, vector<1x32x128xbf16>
      %13 = vector.shape_cast %12 : vector<1x32x128xbf16> to vector<32x128xbf16>
      %cst = arith.constant dense<0.000000e+00> : vector<8x128xf32>
      %14 = tpu.matmul %11, %13, %cst {dimension_numbers = #tpu.dot_dimension_numbers<[1], [0], [0], [1], [0, 0, 1, 1], [], []>} : vector<8x32xbf16>, vector<32x128xbf16>, vector<8x128xf32> -> vector<8x128xf32>
      %15 = arith.negf %14 : vector<8x128xf32>
      %16 = math.exp %15 : vector<8x128xf32>
      %cst_6 = arith.constant 1.000000e+00 : f32
      %17 = vector.broadcast %cst_6 : f32 to vector<8x128xf32>
      %18 = arith.addf %17, %16 : vector<8x128xf32>
      %19 = arith.divf %17, %18 : vector<8x128xf32>
      %20 = arith.mulf %14, %19 : vector<8x128xf32>
      %c0_7 = arith.constant 0 : index
      %c0_8 = arith.constant 0 : index
      %c0_9 = arith.constant 0 : index
      %21 = vector.load %arg5[%c0_7, %c0_8, %c0_9] : memref<1x8x1xi32, #tpu.memory_space<vmem>>, vector<1x8x1xi32>
      %22 = vector.shape_cast %21 : vector<1x8x1xi32> to vector<8x1xi32>
      %23 = vector.broadcast %5 : i32 to vector<8x1xi32>
      %24 = arith.cmpi eq, %22, %23 : vector<8x1xi32>
      %cst_10 = arith.constant 0.000000e+00 : f32
      %25 = vector.shape_cast %24 : vector<8x1xi1> to vector<8x1xi1>
      %26 = vector.broadcast %25 : vector<8x1xi1> to vector<8x128xi1>
      %27 = vector.broadcast %cst_10 : f32 to vector<8x128xf32>
      %28 = arith.select %26, %20, %27 : vector<8x128xi1>, vector<8x128xf32>
      %29 = arith.truncf %28 : vector<8x128xf32> to vector<8x128xbf16>
      %c0_11 = arith.constant 0 : index
      %c0_12 = arith.constant 0 : index
      %c0_13 = arith.constant 0 : index
      %30 = vector.load %arg18[%c0_11, %c0_12, %c0_13] : memref<1x8x32xf32, #tpu.memory_space<vmem>>, vector<1x8x32xf32>
      %31 = vector.shape_cast %30 : vector<1x8x32xf32> to vector<8x32xf32>
      %c0_14 = arith.constant 0 : index
      %c0_15 = arith.constant 0 : index
      %c0_16 = arith.constant 0 : index
      %32 = vector.load %arg17[%c0_14, %c0_15, %c0_16] : memref<1x128x32xbf16, #tpu.memory_space<vmem>>, vector<1x128x32xbf16>
      %33 = vector.shape_cast %32 : vector<1x128x32xbf16> to vector<128x32xbf16>
      %cst_17 = arith.constant dense<0.000000e+00> : vector<8x32xf32>
      %34 = tpu.matmul %29, %33, %cst_17 {dimension_numbers = #tpu.dot_dimension_numbers<[1], [0], [0], [1], [0, 0, 1, 1], [], []>} : vector<8x128xbf16>, vector<128x32xbf16>, vector<8x32xf32> -> vector<8x32xf32>
      %35 = arith.addf %31, %34 : vector<8x32xf32>
      %c0_18 = arith.constant 0 : index
      %c0_19 = arith.constant 0 : index
      %c0_20 = arith.constant 0 : index
      %36 = vector.load %arg18[%c0_18, %c0_19, %c0_20] : memref<1x8x32xf32, #tpu.memory_space<vmem>>, vector<1x8x32xf32>
      %37 = vector.shape_cast %36 : vector<1x8x32xf32> to vector<8x32xf32>
      %38 = vector.shape_cast %35 : vector<8x32xf32> to vector<1x8x32xf32>
      tpu.vector_store %arg18[%c0_18, %c0_19, %c0_20], %38 {strides = array<i32>} : memref<1x8x32xf32, #tpu.memory_space<vmem>>, vector<1x8x32xf32>,
    } else {
    }
    return
  }
  func.func @transform_0(%arg0: i32, %arg1: i32, %arg2: memref<2x4xi32, #tpu.memory_space<smem>>, %arg3: memref<2xi32, #tpu.memory_space<smem>>) -> (i32, i32, i32) {
    %c0_i32 = arith.constant 0 : i32
    %c0_i32_0 = arith.constant 0 : i32
    %c0_i32_1 = arith.constant 0 : i32
    return %arg0, %c0_i32, %c0_i32_0 : i32, i32, i32
  }
  func.func @transform_1(%arg0: i32, %arg1: i32, %arg2: memref<2x4xi32, #tpu.memory_space<smem>>, %arg3: memref<2xi32, #tpu.memory_space<smem>>) -> (i32, i32, i32) {
    %c0_i32 = arith.constant 0 : i32
    %c0_i32_0 = arith.constant 0 : i32
    %c0_i32_1 = arith.constant 0 : i32
    return %arg0, %c0_i32, %c0_i32_0 : i32, i32, i32
  }
  func.func @transform_2(%arg0: i32, %arg1: i32, %arg2: memref<2x4xi32, #tpu.memory_space<smem>>, %arg3: memref<2xi32, #tpu.memory_space<smem>>) -> (i32, i32) {
    %c0_i32 = arith.constant 0 : i32
    %c0_i32_0 = arith.constant 0 : i32
    %c0_i32_1 = arith.constant 0 : i32
    return %c0_i32, %c0_i32_0 : i32, i32
  }
  func.func @transform_3(%arg0: i32, %arg1: i32, %arg2: memref<2x4xi32, #tpu.memory_space<smem>>, %arg3: memref<2xi32, #tpu.memory_space<smem>>) -> (i32, i32) {
    %c0_i32 = arith.constant 0 : i32
    %c0_i32_0 = arith.constant 0 : i32
    %c0_i32_1 = arith.constant 0 : i32
    return %c0_i32, %c0_i32_0 : i32, i32
  }
  func.func @transform_4(%arg0: i32, %arg1: i32, %arg2: memref<2x4xi32, #tpu.memory_space<smem>>, %arg3: memref<2xi32, #tpu.memory_space<smem>>) -> (i32, i32) {
    %c0_i32 = arith.constant 0 : i32
    %c0_i32_0 = arith.constant 0 : i32
    %c0_i32_1 = arith.constant 0 : i32
    return %c0_i32, %c0_i32_0 : i32, i32
  }
  func.func @transform_5(%arg0: i32, %arg1: i32, %arg2: memref<2x4xi32, #tpu.memory_space<smem>>, %arg3: memref<2xi32, #tpu.memory_space<smem>>) -> (i32, i32) {
    %c0_i32 = arith.constant 0 : i32
    %c0_i32_0 = arith.constant 0 : i32
    %c0_i32_1 = arith.constant 0 : i32
    return %c0_i32, %c0_i32_0 : i32, i32
  }
  func.func @transform_6(%arg0: i32, %arg1: i32, %arg2: memref<2x4xi32, #tpu.memory_space<smem>>, %arg3: memref<2xi32, #tpu.memory_space<smem>>) -> (i32, i32) {
    %c0_i32 = arith.constant 0 : i32
    %c0_i32_0 = arith.constant 0 : i32
    %c0_i32_1 = arith.constant 0 : i32
    return %c0_i32, %c0_i32_0 : i32, i32
  }
  func.func @transform_7(%arg0: i32, %arg1: i32, %arg2: memref<2x4xi32, #tpu.memory_space<smem>>, %arg3: memref<2xi32, #tpu.memory_space<smem>>) -> (i32, i32) {
    %c0_i32 = arith.constant 0 : i32
    %c0_i32_0 = arith.constant 0 : i32
    %c0_i32_1 = arith.constant 0 : i32
    return %c0_i32, %c0_i32_0 : i32, i32
  }
  func.func @transform_8(%arg0: i32, %arg1: i32, %arg2: memref<2x4xi32, #tpu.memory_space<smem>>, %arg3: memref<2xi32, #tpu.memory_space<smem>>) -> (i32, i32) {
    %c0_i32 = arith.constant 0 : i32
    %c0_i32_0 = arith.constant 0 : i32
    %c0_i32_1 = arith.constant 0 : i32
    return %c0_i32, %c0_i32_0 : i32, i32
  }
  func.func @transform_9(%arg0: i32, %arg1: i32, %arg2: memref<2x4xi32, #tpu.memory_space<smem>>, %arg3: memref<2xi32, #tpu.memory_space<smem>>) -> (i32, i32) {
    %c0_i32 = arith.constant 0 : i32
    %c0_i32_0 = arith.constant 0 : i32
    %c0_i32_1 = arith.constant 0 : i32
    return %c0_i32, %c0_i32_0 : i32, i32
  }
  func.func @transform_10(%arg0: i32, %arg1: i32, %arg2: memref<2x4xi32, #tpu.memory_space<smem>>, %arg3: memref<2xi32, #tpu.memory_space<smem>>) -> (i32, i32) {
    %c0_i32 = arith.constant 0 : i32
    %c0_i32_0 = arith.constant 0 : i32
    %c0_i32_1 = arith.constant 0 : i32
    return %c0_i32, %c0_i32_0 : i32, i32
  }
  func.func @transform_11(%arg0: i32, %arg1: i32, %arg2: memref<2x4xi32, #tpu.memory_space<smem>>, %arg3: memref<2xi32, #tpu.memory_space<smem>>) -> (i32, i32) {
    %c0_i32 = arith.constant 0 : i32
    %c0_i32_0 = arith.constant 0 : i32
    %c0_i32_1 = arith.constant 0 : i32
    return %c0_i32, %c0_i32_0 : i32, i32
  }
  func.func @transform_12(%arg0: i32, %arg1: i32, %arg2: memref<2x4xi32, #tpu.memory_space<smem>>, %arg3: memref<2xi32, #tpu.memory_space<smem>>) -> (i32, i32, i32) {
    %0 = arith.index_cast %arg0 : i32 to index
    %1 = arith.index_cast %arg1 : i32 to index
    %2 = memref.load %arg2[%0, %1] : memref<2x4xi32, #tpu.memory_space<smem>>
    %c0_i32 = arith.constant 0 : i32
    %c0_i32_0 = arith.constant 0 : i32
    %c0_i32_1 = arith.constant 0 : i32
    return %2, %c0_i32, %c0_i32_0 : i32, i32, i32
  }
  func.func @transform_13(%arg0: i32, %arg1: i32, %arg2: memref<2x4xi32, #tpu.memory_space<smem>>, %arg3: memref<2xi32, #tpu.memory_space<smem>>) -> (i32, i32, i32) {
    %0 = arith.index_cast %arg0 : i32 to index
    %1 = arith.index_cast %arg1 : i32 to index
    %2 = memref.load %arg2[%0, %1] : memref<2x4xi32, #tpu.memory_space<smem>>
    %c0_i32 = arith.constant 0 : i32
    %c0_i32_0 = arith.constant 0 : i32
    %c0_i32_1 = arith.constant 0 : i32
    return %2, %c0_i32, %c0_i32_0 : i32, i32, i32
  }
  func.func @transform_14(%arg0: i32, %arg1: i32, %arg2: memref<2x4xi32, #tpu.memory_space<smem>>, %arg3: memref<2xi32, #tpu.memory_space<smem>>) -> (i32, i32, i32) {
    %c0_i32 = arith.constant 0 : i32
    %c0_i32_0 = arith.constant 0 : i32
    %c0_i32_1 = arith.constant 0 : i32
    return %arg0, %c0_i32, %c0_i32_0 : i32, i32, i32
  }
}

</mosaic_0001>

<llo_original>
// kernel: tpu_custom_call.1
$region0: #{tpu_custom_call.1}
  #allocation0 [shape = 'u32[]', space=smem, size = 0x4, offset = 0x4, fixed_abs, tag = 'smem constant byte address 0x4 - core index']
  #allocation1 [shape = 'u32[144,128]{1,0:T(1,128)}', space=vmem, size = 0x12000, scoped, tag = 'internal scratch']
  #allocation2 [shape = 'bf16[8,32]{1,0:T(8,128)(2,1)}', space=vmem, size = 0x800, scoped, tag = 'scratch operand']
  #allocation3 [shape = 's32[1]{0}', space=sflag, size = 0x4, scoped, tag = 'scoped memory for tpu_custom_call.1']
  #allocation4 [shape = 'u8[1024]{0}', space=smem, size = 0x400, scoped, tag = 'prefetched SMEM operand 0']
  #allocation5 [shape = 'u8[512]{0}', space=smem, size = 0x200, scoped, tag = 'prefetched SMEM operand 1']
  %s0 = inlined_call_operand.vmem [shape: s32[2,4], index: 0, kind: input, shape index: {}]
  %s1 = inlined_call_operand.vmem [shape: s32[2], index: 1, kind: input, shape index: {}]
  %s2 = inlined_call_operand.vmem [shape: f32[2,8,32], index: 2, kind: input, shape index: {}]
  %s3 = inlined_call_operand.vmem [shape: s32[2,8,1], index: 3, kind: input, shape index: {}]
  %s4 = inlined_call_operand.vmem [shape: f32[1,32], index: 4, kind: input, shape index: {}]
  %s5 = inlined_call_operand.vmem [shape: f32[1,32], index: 5, kind: input, shape index: {}]
  %s6 = inlined_call_operand.vmem [shape: f32[8,32], index: 6, kind: input, shape index: {}]
  %s7 = inlined_call_operand.vmem [shape: f32[8,32], index: 7, kind: input, shape index: {}]
  %s8 = inlined_call_operand.vmem [shape: bf16[32,32], index: 8, kind: input, shape index: {}]
  %s9 = inlined_call_operand.vmem [shape: bf16[32,32], index: 9, kind: input, shape index: {}]
  %s10 = inlined_call_operand.vmem [shape: bf16[32,32], index: 10, kind: input, shape index: {}]
  %s11 = inlined_call_operand.vmem [shape: bf16[32,32], index: 11, kind: input, shape index: {}]
  %s12 = inlined_call_operand.vmem [shape: bf16[32,32], index: 12, kind: input, shape index: {}]
  %s13 = inlined_call_operand.vmem [shape: bf16[32,32], index: 13, kind: input, shape index: {}]
  %s14 = inlined_call_operand.vmem [shape: bf16[4,32,128], index: 14, kind: input, shape index: {}]
  %s15 = inlined_call_operand.vmem [shape: bf16[4,128,32], index: 15, kind: input, shape index: {}]
  %s16 = inlined_call_operand.hbm [shape: f32[2,8,32], index: 16, kind: output, shape index: {}]
  %s17 = sld [smem:[#allocation0]]
  $region97: #{tpu_custom_call.1} parent=0
    _
  %s19 = ssub.s32 1, %s17
  %s20 = scalar_select 0, %s19, %s17
  %s21 = sshll.u32 %s0, 4
  %s22 = int_to_ptr.vmem [resolvable:$true] %s21
  %24 = dma.vmem_to_smem %s22, 32, [#allocation4], [#allocation3]
  %s25 = sshll.u32 %s1, 4
  %s26 = int_to_ptr.vmem [resolvable:$true] %s25
  %28 = dma.vmem_to_smem %s26, 16, [#allocation5], [#allocation3]
  %29 = dma.done [#allocation3], 48
  %30 = sfence
  $region1: #{tpu_custom_call.1} parent=0
    #allocation6 [shape = 'u8[8192]{0}', space=vmem, size = 0x2000, scoped, tag = 'output window, operand 0']
    #allocation7 [shape = 's32[2]{0}', space=sflag, size = 0x8, scoped, tag = 'scoped memory for tpu_custom_call.1']
    %31 = vsyncpa [#allocation7], 0
    %s32 = scalar_lea.sflag [#allocation7], 1
    %33 = vsyncpa %s32, 0
    loop: start=0, step=1, limit=10
    $region2: #{tpu_custom_call.1} parent=1 // loop_pre_header
      _
    $region3: #{tpu_custom_call.1} parent=1 // loop_header
      %s35 = sphi 0, %s39
      %p36 = scmp.ge.s32.totalorder %s35, 10
      %s42 = sphi 0, %s54
      %s43 = sphi 0, %s50
      %s44 = sphi 0, %s42
      %s45 = sphi 0, %s43
      %s46 = sphi 0, %s44
      %s47 = sphi 0, %s45
      %s57 = sphi 0, %s59
      %s60 = sphi 0, %s57
      %s61 = sphi 0, %s60
      %s77 = sphi 0, %s61
      %s83 = sphi 0, %s85
      %s86 = sphi 0, %s83
      %s87 = sphi 0, %s86
      %s103 = sphi 0, %s87
      %s107 = sphi 0, %s107
      %s109 = sphi 0, %s107
      %s110 = sphi 0, %s109
      %s124 = sphi 0, %s110
      %s128 = sphi 0, %s128
      %s130 = sphi 0, %s128
      %s131 = sphi 0, %s130
      %s145 = sphi 0, %s131
      %s149 = sphi 0, %s149
      %s151 = sphi 0, %s149
      %s152 = sphi 0, %s151
      %s166 = sphi 0, %s152
      %s170 = sphi 0, %s170
      %s172 = sphi 0, %s170
      %s173 = sphi 0, %s172
      %s187 = sphi 0, %s173
      %s191 = sphi 0, %s191
      %s193 = sphi 0, %s191
      %s194 = sphi 0, %s193
      %s208 = sphi 0, %s194
      %s212 = sphi 0, %s212
      %s214 = sphi 0, %s212
      %s215 = sphi 0, %s214
      %s229 = sphi 0, %s215
      %s233 = sphi 0, %s233
      %s235 = sphi 0, %s233
      %s236 = sphi 0, %s235
      %s250 = sphi 0, %s236
      %s254 = sphi 0, %s254
      %s256 = sphi 0, %s254
      %s257 = sphi 0, %s256
      %s271 = sphi 0, %s257
      %s275 = sphi 0, %s275
      %s277 = sphi 0, %s275
      %s278 = sphi 0, %s277
      %s292 = sphi 0, %s278
      %s296 = sphi 0, %s296
      %s298 = sphi 0, %s296
      %s299 = sphi 0, %s298
      %s313 = sphi 0, %s299
      %s335 = sphi 0, %s337
      %s338 = sphi 0, %s335
      %s339 = sphi 0, %s338
      %s355 = sphi 0, %s339
      %s377 = sphi 0, %s379
      %s380 = sphi 0, %s377
      %s381 = sphi 0, %s380
      %s397 = sphi 0, %s381
      %s403 = sphi 0, %s405
      %s406 = sphi 0, %s403
      %s407 = sphi 0, %s406
      %s423 = sphi 0, %s407
    $region4: #{tpu_custom_call.1} parent=1 // loop_header_branch
      %38 = sbr.rel (%p36) target = $region8
    $region5: #{tpu_custom_call.1} parent=1 // loop_body
      %s40 = ssub.s32 %s35, 1
      %s41 = ssub.s32 %s35, 2
      %s48 = sadd.s32 1, %s43
      %p49 = scmp.ge.s32.totalorder %s48, 4
      %s50 = scalar_select %p49, 0, %s48
      %s51 = sadd.s32 1, %s42
      %s52 = scalar_select %p49, %s51, %s42
      %p53 = scmp.ge.s32.totalorder %s52, 2
      %s54 = scalar_select %p53, 0, %s52
      %s55 = ssub.s32 %s42, %s54
      %p56 = scmp.eq.s32.totalorder %s55, 0
      %s58 = sadd.s32 %s57, 1
      %s59 = scalar_select %p56, %s57, %s58
      %p62 = pneg %p56
      %p63 = scmp.eq.s32.totalorder %s35, 7
      %p64 = por %p62, %p63
      %p65 = scmp.ne.s32.totalorder %s57, %s60
      %p66 = scmp.eq.s32.totalorder %s35, 0
      %p67 = por %p65, %p66
      %p68 = scmp.ne.s32.totalorder %s57, %s60
      %p69 = scmp.eq.s32.totalorder %s40, 7
      %p70 = por %p68, %p69
      %p71 = scmp.ne.s32.totalorder %s60, %s61
      %p72 = scmp.eq.s32.totalorder %s40, 0
      %p73 = por %p71, %p72
      %p74 = scmp.ne.s32.totalorder %s60, %s61
      %p75 = scmp.eq.s32.totalorder %s41, 7
      %p76 = por %p74, %p75
      %p78 = scmp.ne.s32.totalorder %s61, %s77
      %p79 = scmp.eq.s32.totalorder %s41, 0
      %p80 = por %p78, %p79
      %s81 = ssub.s32 %s42, %s54
      %p82 = scmp.eq.s32.totalorder %s81, 0
      %s84 = sadd.s32 %s83, 1
      %s85 = scalar_select %p82, %s83, %s84
      %p88 = pneg %p82
      %p89 = scmp.eq.s32.totalorder %s35, 7
      %p90 = por %p88, %p89
      %p91 = scmp.ne.s32.totalorder %s83, %s86
      %p92 = scmp.eq.s32.totalorder %s35, 0
      %p93 = por %p91, %p92
      %p94 = scmp.ne.s32.totalorder %s83, %s86
      %p95 = scmp.eq.s32.totalorder %s40, 7
      %p96 = por %p94, %p95
      %p97 = scmp.ne.s32.totalorder %s86, %s87
      %p98 = scmp.eq.s32.totalorder %s40, 0
      %p99 = por %p97, %p98
      %p100 = scmp.ne.s32.totalorder %s86, %s87
      %p101 = scmp.eq.s32.totalorder %s41, 7
      %p102 = por %p100, %p101
      %p104 = scmp.ne.s32.totalorder %s87, %s103
      %p105 = scmp.eq.s32.totalorder %s41, 0
      %p106 = por %p104, %p105
      %s108 = sadd.s32 %s107, 1
      %p111 = scmp.eq.s32.totalorder %s35, 7
      %p112 = scmp.ne.s32.totalorder %s107, %s109
      %p113 = scmp.eq.s32.totalorder %s35, 0
      %p114 = por %p112, %p113
      %p115 = scmp.ne.s32.totalorder %s107, %s109
      %p116 = scmp.eq.s32.totalorder %s40, 7
      %p117 = por %p115, %p116
      %p118 = scmp.ne.s32.totalorder %s109, %s110
      %p119 = scmp.eq.s32.totalorder %s40, 0
      %p120 = por %p118, %p119
      %p121 = scmp.ne.s32.totalorder %s109, %s110
      %p122 = scmp.eq.s32.totalorder %s41, 7
      %p123 = por %p121, %p122
      %p125 = scmp.ne.s32.totalorder %s110, %s124
      %p126 = scmp.eq.s32.totalorder %s41, 0
      %p127 = por %p125, %p126
      %s129 = sadd.s32 %s128, 1
      %p132 = scmp.eq.s32.totalorder %s35, 7
      %p133 = scmp.ne.s32.totalorder %s128, %s130
      %p134 = scmp.eq.s32.totalorder %s35, 0
      %p135 = por %p133, %p134
      %p136 = scmp.ne.s32.totalorder %s128, %s130
      %p137 = scmp.eq.s32.totalorder %s40, 7
      %p138 = por %p136, %p137
      %p139 = scmp.ne.s32.totalorder %s130, %s131
      %p140 = scmp.eq.s32.totalorder %s40, 0
      %p141 = por %p139, %p140
      %p142 = scmp.ne.s32.totalorder %s130, %s131
      %p143 = scmp.eq.s32.totalorder %s41, 7
      %p144 = por %p142, %p143
      %p146 = scmp.ne.s32.totalorder %s131, %s145
      %p147 = scmp.eq.s32.totalorder %s41, 0
      %p148 = por %p146, %p147
      %s150 = sadd.s32 %s149, 1
      %p153 = scmp.eq.s32.totalorder %s35, 7
      %p154 = scmp.ne.s32.totalorder %s149, %s151
      %p155 = scmp.eq.s32.totalorder %s35, 0
      %p156 = por %p154, %p155
      %p157 = scmp.ne.s32.totalorder %s149, %s151
      %p158 = scmp.eq.s32.totalorder %s40, 7
      %p159 = por %p157, %p158
      %p160 = scmp.ne.s32.totalorder %s151, %s152
      %p161 = scmp.eq.s32.totalorder %s40, 0
      %p162 = por %p160, %p161
      %p163 = scmp.ne.s32.totalorder %s151, %s152
      %p164 = scmp.eq.s32.totalorder %s41, 7
      %p165 = por %p163, %p164
      %p167 = scmp.ne.s32.totalorder %s152, %s166
      %p168 = scmp.eq.s32.totalorder %s41, 0
      %p169 = por %p167, %p168
      %s171 = sadd.s32 %s170, 1
      %p174 = scmp.eq.s32.totalorder %s35, 7
      %p175 = scmp.ne.s32.totalorder %s170, %s172
      %p176 = scmp.eq.s32.totalorder %s35, 0
      %p177 = por %p175, %p176
      %p178 = scmp.ne.s32.totalorder %s170, %s172
      %p179 = scmp.eq.s32.totalorder %s40, 7
      %p180 = por %p178, %p179
      %p181 = scmp.ne.s32.totalorder %s172, %s173
      %p182 = scmp.eq.s32.totalorder %s40, 0
      %p183 = por %p181, %p182
      %p184 = scmp.ne.s32.totalorder %s172, %s173
      %p185 = scmp.eq.s32.totalorder %s41, 7
      %p186 = por %p184, %p185
      %p188 = scmp.ne.s32.totalorder %s173, %s187
      %p189 = scmp.eq.s32.totalorder %s41, 0
      %p190 = por %p188, %p189
      %s192 = sadd.s32 %s191, 1
      %p195 = scmp.eq.s32.totalorder %s35, 7
      %p196 = scmp.ne.s32.totalorder %s191, %s193
      %p197 = scmp.eq.s32.totalorder %s35, 0
      %p198 = por %p196, %p197
      %p199 = scmp.ne.s32.totalorder %s191, %s193
      %p200 = scmp.eq.s32.totalorder %s40, 7
      %p201 = por %p199, %p200
      %p202 = scmp.ne.s32.totalorder %s193, %s194
      %p203 = scmp.eq.s32.totalorder %s40, 0
      %p204 = por %p202, %p203
      %p205 = scmp.ne.s32.totalorder %s193, %s194
      %p206 = scmp.eq.s32.totalorder %s41, 7
      %p207 = por %p205, %p206
      %p209 = scmp.ne.s32.totalorder %s194, %s208
      %p210 = scmp.eq.s32.totalorder %s41, 0
      %p211 = por %p209, %p210
      %s213 = sadd.s32 %s212, 1
      %p216 = scmp.eq.s32.totalorder %s35, 7
      %p217 = scmp.ne.s32.totalorder %s212, %s214
      %p218 = scmp.eq.s32.totalorder %s35, 0
      %p219 = por %p217, %p218
      %p220 = scmp.ne.s32.totalorder %s212, %s214
      %p221 = scmp.eq.s32.totalorder %s40, 7
      %p222 = por %p220, %p221
      %p223 = scmp.ne.s32.totalorder %s214, %s215
      %p224 = scmp.eq.s32.totalorder %s40, 0
      %p225 = por %p223, %p224
      %p226 = scmp.ne.s32.totalorder %s214, %s215
      %p227 = scmp.eq.s32.totalorder %s41, 7
      %p228 = por %p226, %p227
      %p230 = scmp.ne.s32.totalorder %s215, %s229
      %p231 = scmp.eq.s32.totalorder %s41, 0
      %p232 = por %p230, %p231
      %s234 = sadd.s32 %s233, 1
      %p237 = scmp.eq.s32.totalorder %s35, 7
      %p238 = scmp.ne.s32.totalorder %s233, %s235
      %p239 = scmp.eq.s32.totalorder %s35, 0
      %p240 = por %p238, %p239
      %p241 = scmp.ne.s32.totalorder %s233, %s235
      %p242 = scmp.eq.s32.totalorder %s40, 7
      %p243 = por %p241, %p242
      %p244 = scmp.ne.s32.totalorder %s235, %s236
      %p245 = scmp.eq.s32.totalorder %s40, 0
      %p246 = por %p244, %p245
      %p247 = scmp.ne.s32.totalorder %s235, %s236
      %p248 = scmp.eq.s32.totalorder %s41, 7
      %p249 = por %p247, %p248
      %p251 = scmp.ne.s32.totalorder %s236, %s250
      %p252 = scmp.eq.s32.totalorder %s41, 0
      %p253 = por %p251, %p252
      %s255 = sadd.s32 %s254, 1
      %p258 = scmp.eq.s32.totalorder %s35, 7
      %p259 = scmp.ne.s32.totalorder %s254, %s256
      %p260 = scmp.eq.s32.totalorder %s35, 0
      %p261 = por %p259, %p260
      %p262 = scmp.ne.s32.totalorder %s254, %s256
      %p263 = scmp.eq.s32.totalorder %s40, 7
      %p264 = por %p262, %p263
      %p265 = scmp.ne.s32.totalorder %s256, %s257
      %p266 = scmp.eq.s32.totalorder %s40, 0
      %p267 = por %p265, %p266
      %p268 = scmp.ne.s32.totalorder %s256, %s257
      %p269 = scmp.eq.s32.totalorder %s41, 7
      %p270 = por %p268, %p269
      %p272 = scmp.ne.s32.totalorder %s257, %s271
      %p273 = scmp.eq.s32.totalorder %s41, 0
      %p274 = por %p272, %p273
      %s276 = sadd.s32 %s275, 1
      %p279 = scmp.eq.s32.totalorder %s35, 7
      %p280 = scmp.ne.s32.totalorder %s275, %s277
      %p281 = scmp.eq.s32.totalorder %s35, 0
      %p282 = por %p280, %p281
      %p283 = scmp.ne.s32.totalorder %s275, %s277
      %p284 = scmp.eq.s32.totalorder %s40, 7
      %p285 = por %p283, %p284
      %p286 = scmp.ne.s32.totalorder %s277, %s278
      %p287 = scmp.eq.s32.totalorder %s40, 0
      %p288 = por %p286, %p287
      %p289 = scmp.ne.s32.totalorder %s277, %s278
      %p290 = scmp.eq.s32.totalorder %s41, 7
      %p291 = por %p289, %p290
      %p293 = scmp.ne.s32.totalorder %s278, %s292
      %p294 = scmp.eq.s32.totalorder %s41, 0
      %p295 = por %p293, %p294
      %s297 = sadd.s32 %s296, 1
      %p300 = scmp.eq.s32.totalorder %s35, 7
      %p301 = scmp.ne.s32.totalorder %s296, %s298
      %p302 = scmp.eq.s32.totalorder %s35, 0
      %p303 = por %p301, %p302
      %p304 = scmp.ne.s32.totalorder %s296, %s298
      %p305 = scmp.eq.s32.totalorder %s40, 7
      %p306 = por %p304, %p305
      %p307 = scmp.ne.s32.totalorder %s298, %s299
      %p308 = scmp.eq.s32.totalorder %s40, 0
      %p309 = por %p307, %p308
      %p310 = scmp.ne.s32.totalorder %s298, %s299
      %p311 = scmp.eq.s32.totalorder %s41, 7
      %p312 = por %p310, %p311
      %p314 = scmp.ne.s32.totalorder %s299, %s313
      %p315 = scmp.eq.s32.totalorder %s41, 0
      %p316 = por %p314, %p315
      %s317 = sshra.s32 %s43, 7
      %s318 = sand.u32 %s43, 127
      %s319 = sadd.s32 %s317, %s42
      %s320 = smul.u32 %s319, 128
      %s321 = sshra.s32 %s43, 7
      %s322 = sand.u32 %s43, 127
      %s323 = sadd.s32 %s320, %s322
      %s324 = sld [smem:[#allocation4 + %s323]]
      %s325 = sshra.s32 %s50, 7
      %s326 = sand.u32 %s50, 127
      %s327 = sadd.s32 %s325, %s54
      %s328 = smul.u32 %s327, 128
      %s329 = sshra.s32 %s50, 7
      %s330 = sand.u32 %s50, 127
      %s331 = sadd.s32 %s328, %s330
      %s332 = sld [smem:[#allocation4 + %s331]]
      %s333 = ssub.s32 %s324, %s332
      %p334 = scmp.eq.s32.totalorder %s333, 0
      %s336 = sadd.s32 %s335, 1
      %s337 = scalar_select %p334, %s335, %s336
      %p340 = pneg %p334
      %p341 = scmp.eq.s32.totalorder %s35, 7
      %p342 = por %p340, %p341
      %p343 = scmp.ne.s32.totalorder %s335, %s338
      %p344 = scmp.eq.s32.totalorder %s35, 0
      %p345 = por %p343, %p344
      %p346 = scmp.ne.s32.totalorder %s335, %s338
      %p347 = scmp.eq.s32.totalorder %s40, 7
      %p348 = por %p346, %p347
      %p349 = scmp.ne.s32.totalorder %s338, %s339
      %p350 = scmp.eq.s32.totalorder %s40, 0
      %p351 = por %p349, %p350
      %p352 = scmp.ne.s32.totalorder %s338, %s339
      %p353 = scmp.eq.s32.totalorder %s41, 7
      %p354 = por %p352, %p353
      %p356 = scmp.ne.s32.totalorder %s339, %s355
      %p357 = scmp.eq.s32.totalorder %s41, 0
      %p358 = por %p356, %p357
      %s359 = sshra.s32 %s43, 7
      %s360 = sand.u32 %s43, 127
      %s361 = sadd.s32 %s359, %s42
      %s362 = smul.u32 %s361, 128
      %s363 = sshra.s32 %s43, 7
      %s364 = sand.u32 %s43, 127
      %s365 = sadd.s32 %s362, %s364
      %s366 = sld [smem:[#allocation4 + %s365]]
      %s367 = sshra.s32 %s50, 7
      %s368 = sand.u32 %s50, 127
      %s369 = sadd.s32 %s367, %s54
      %s370 = smul.u32 %s369, 128
      %s371 = sshra.s32 %s50, 7
      %s372 = sand.u32 %s50, 127
      %s373 = sadd.s32 %s370, %s372
      %s374 = sld [smem:[#allocation4 + %s373]]
      %s375 = ssub.s32 %s366, %s374
      %p376 = scmp.eq.s32.totalorder %s375, 0
      %s378 = sadd.s32 %s377, 1
      %s379 = scalar_select %p376, %s377, %s378
      %p382 = pneg %p376
      %p383 = scmp.eq.s32.totalorder %s35, 7
      %p384 = por %p382, %p383
      %p385 = scmp.ne.s32.totalorder %s377, %s380
      %p386 = scmp.eq.s32.totalorder %s35, 0
      %p387 = por %p385, %p386
      %p388 = scmp.ne.s32.totalorder %s377, %s380
      %p389 = scmp.eq.s32.totalorder %s40, 7
      %p390 = por %p388, %p389
      %p391 = scmp.ne.s32.totalorder %s380, %s381
      %p392 = scmp.eq.s32.totalorder %s40, 0
      %p393 = por %p391, %p392
      %p394 = scmp.ne.s32.totalorder %s380, %s381
      %p395 = scmp.eq.s32.totalorder %s41, 7
      %p396 = por %p394, %p395
      %p398 = scmp.ne.s32.totalorder %s381, %s397
      %p399 = scmp.eq.s32.totalorder %s41, 0
      %p400 = por %p398, %p399
      %s401 = ssub.s32 %s42, %s54
      %p402 = scmp.eq.s32.totalorder %s401, 0
      %s404 = sadd.s32 %s403, 1
      %s405 = scalar_select %p402, %s403, %s404
      %p408 = pneg %p402
      %p409 = scmp.eq.s32.totalorder %s35, 7
      %p410 = por %p408, %p409
      %p411 = scmp.ne.s32.totalorder %s403, %s406
      %p412 = scmp.eq.s32.totalorder %s35, 0
      %p413 = por %p411, %p412
      %p414 = scmp.ne.s32.totalorder %s403, %s406
      %p415 = scmp.eq.s32.totalorder %s40, 7
      %p416 = por %p414, %p415
      %p417 = scmp.ne.s32.totalorder %s406, %s407
      %p418 = scmp.eq.s32.totalorder %s40, 0
      %p419 = por %p417, %p418
      %p420 = scmp.ne.s32.totalorder %s406, %s407
      %p421 = scmp.eq.s32.totalorder %s41, 7
      %p422 = por %p420, %p421
      %p424 = scmp.ne.s32.totalorder %s407, %s423
      %p425 = scmp.eq.s32.totalorder %s41, 0
      %p426 = por %p424, %p425
      %p427 = scmp.le.s32.totalorder 1, %s35
      %p428 = scmp.lt.s32.totalorder %s35, 9
      %p429 = pnand %p427, %p428
      %p430 = pneg %p429
      // Predicated region
      $region9: #{tpu_custom_call.1} parent=5 // pred_check
        _
      $region10: #{tpu_custom_call.1} parent=5 // pred_check_branch
        %432 = sbr.rel (%p429) target = $region12
      $region11: #{tpu_custom_call.1} parent=5 // pred_region
        %s433 = ssub.s32 %s35, 1
        // Predicated region
        $region13: #{tpu_custom_call.1} parent=11 // pred_check
          %p434 = pneg %p120
        $region14: #{tpu_custom_call.1} parent=11 // pred_check_branch
          %436 = sbr.rel (%p434) target = $region16
        $region15: #{tpu_custom_call.1} parent=11 // pred_region
          _
        $region16: #{tpu_custom_call.1} parent=11 // pred_fallthru
          _
        // Predicated region
        $region17: #{tpu_custom_call.1} parent=11 // pred_check
          %p437 = pneg %p141
        $region18: #{tpu_custom_call.1} parent=11 // pred_check_branch
          %439 = sbr.rel (%p437) target = $region20
        $region19: #{tpu_custom_call.1} parent=11 // pred_region
          _
        $region20: #{tpu_custom_call.1} parent=11 // pred_fallthru
          _
        // Predicated region
        $region21: #{tpu_custom_call.1} parent=11 // pred_check
          %p440 = pneg %p162
        $region22: #{tpu_custom_call.1} parent=11 // pred_check_branch
          %442 = sbr.rel (%p440) target = $region24
        $region23: #{tpu_custom_call.1} parent=11 // pred_region
          _
        $region24: #{tpu_custom_call.1} parent=11 // pred_fallthru
          _
        // Predicated region
        $region25: #{tpu_custom_call.1} parent=11 // pred_check
          %p443 = pneg %p183
        $region26: #{tpu_custom_call.1} parent=11 // pred_check_branch
          %445 = sbr.rel (%p443) target = $region28
        $region27: #{tpu_custom_call.1} parent=11 // pred_region
          _
        $region28: #{tpu_custom_call.1} parent=11 // pred_fallthru
          _
        // Predicated region
        $region29: #{tpu_custom_call.1} parent=11 // pred_check
          %p446 = pneg %p204
        $region30: #{tpu_custom_call.1} parent=11 // pred_check_branch
          %448 = sbr.rel (%p446) target = $region32
        $region31: #{tpu_custom_call.1} parent=11 // pred_region
          _
        $region32: #{tpu_custom_call.1} parent=11 // pred_fallthru
          _
        // Predicated region
        $region33: #{tpu_custom_call.1} parent=11 // pred_check
          %p449 = pneg %p225
        $region34: #{tpu_custom_call.1} parent=11 // pred_check_branch
          %451 = sbr.rel (%p449) target = $region36
        $region35: #{tpu_custom_call.1} parent=11 // pred_region
          _
        $region36: #{tpu_custom_call.1} parent=11 // pred_fallthru
          _
        // Predicated region
        $region37: #{tpu_custom_call.1} parent=11 // pred_check
          %p452 = pneg %p246
        $region38: #{tpu_custom_call.1} parent=11 // pred_check_branch
          %454 = sbr.rel (%p452) target = $region40
        $region39: #{tpu_custom_call.1} parent=11 // pred_region
          _
        $region40: #{tpu_custom_call.1} parent=11 // pred_fallthru
          _
        // Predicated region
        $region41: #{tpu_custom_call.1} parent=11 // pred_check
          %p455 = pneg %p267
        $region42: #{tpu_custom_call.1} parent=11 // pred_check_branch
          %457 = sbr.rel (%p455) target = $region44
        $region43: #{tpu_custom_call.1} parent=11 // pred_region
          _
        $region44: #{tpu_custom_call.1} parent=11 // pred_fallthru
          _
        // Predicated region
        $region45: #{tpu_custom_call.1} parent=11 // pred_check
          %p458 = pneg %p288
        $region46: #{tpu_custom_call.1} parent=11 // pred_check_branch
          %460 = sbr.rel (%p458) target = $region48
        $region47: #{tpu_custom_call.1} parent=11 // pred_region
          _
        $region48: #{tpu_custom_call.1} parent=11 // pred_fallthru
          _
        // Predicated region
        $region49: #{tpu_custom_call.1} parent=11 // pred_check
          %p461 = pneg %p309
        $region50: #{tpu_custom_call.1} parent=11 // pred_check_branch
          %463 = sbr.rel (%p461) target = $region52
        $region51: #{tpu_custom_call.1} parent=11 // pred_region
          _
        $region52: #{tpu_custom_call.1} parent=11 // pred_fallthru
          _
      $region12: #{tpu_custom_call.1} parent=5 // pred_fallthru
        _
      %p464 = scmp.lt.s32.totalorder %s35, 8
      // Predicated region
      $region53: #{tpu_custom_call.1} parent=5 // pred_check
        %p465 = pneg %p464
      $region54: #{tpu_custom_call.1} parent=5 // pred_check_branch
        %467 = sbr.rel (%p465) target = $region56
      $region55: #{tpu_custom_call.1} parent=5 // pred_region
        // Predicated region
        $region57: #{tpu_custom_call.1} parent=55 // pred_check
          %p468 = pneg %p67
        $region58: #{tpu_custom_call.1} parent=55 // pred_check_branch
          %470 = sbr.rel (%p468) target = $region60
        $region59: #{tpu_custom_call.1} parent=55 // pred_region
          %p471 = scmp.lt.s32.totalorder %s42, 1
          %s472 = scalar_select %p471, %s42, 1
          %s473 = smul.addr %s472, 8
          %s474 = scalar_lea.vmem %s2, %s473
        $region60: #{tpu_custom_call.1} parent=55 // pred_fallthru
          _
        // Predicated region
        $region61: #{tpu_custom_call.1} parent=55 // pred_check
          %p475 = pneg %p93
        $region62: #{tpu_custom_call.1} parent=55 // pred_check_branch
          %477 = sbr.rel (%p475) target = $region64
        $region63: #{tpu_custom_call.1} parent=55 // pred_region
          %p478 = scmp.lt.s32.totalorder %s42, 1
          %s479 = scalar_select %p478, %s42, 1
          %s480 = smul.addr %s479, 8
          %s481 = scalar_lea.vmem %s3, %s480
        $region64: #{tpu_custom_call.1} parent=55 // pred_fallthru
          _
        // Predicated region
        $region65: #{tpu_custom_call.1} parent=55 // pred_check
          %p482 = pneg %p345
        $region66: #{tpu_custom_call.1} parent=55 // pred_check_branch
          %484 = sbr.rel (%p482) target = $region68
        $region67: #{tpu_custom_call.1} parent=55 // pred_region
          %s485 = sshra.s32 %s43, 7
          %s486 = sand.u32 %s43, 127
          %s487 = sadd.s32 %s485, %s42
          %s488 = smul.u32 %s487, 128
          %s489 = sshra.s32 %s43, 7
          %s490 = sand.u32 %s43, 127
          %s491 = sadd.s32 %s488, %s490
          %s492 = sld [smem:[#allocation4 + %s491]]
          %p493 = scmp.lt.s32.totalorder %s492, 3
          %s494 = scalar_select %p493, %s492, 3
          %s495 = smul.addr %s494, 4
          %s496 = smul.addr %s495, 4
          %s497 = scalar_lea.vmem %s14, %s496
          %s498 = sshra.s32 %s43, 7
          %s499 = sand.u32 %s43, 127
          %s500 = sadd.s32 %s498, %s42
          %s501 = smul.u32 %s500, 128
          %s502 = sshra.s32 %s43, 7
          %s503 = sand.u32 %s43, 127
          %s504 = sadd.s32 %s501, %s503
          %s505 = sld [smem:[#allocation4 + %s504]]
        $region68: #{tpu_custom_call.1} parent=55 // pred_fallthru
          _
        // Predicated region
        $region69: #{tpu_custom_call.1} parent=55 // pred_check
          %p506 = pneg %p387
        $region70: #{tpu_custom_call.1} parent=55 // pred_check_branch
          %508 = sbr.rel (%p506) target = $region72
        $region71: #{tpu_custom_call.1} parent=55 // pred_region
          %s509 = sshra.s32 %s43, 7
          %s510 = sand.u32 %s43, 127
          %s511 = sadd.s32 %s509, %s42
          %s512 = smul.u32 %s511, 128
          %s513 = sshra.s32 %s43, 7
          %s514 = sand.u32 %s43, 127
          %s515 = sadd.s32 %s512, %s514
          %s516 = sld [smem:[#allocation4 + %s515]]
          %p517 = scmp.lt.s32.totalorder %s516, 3
          %s518 = scalar_select %p517, %s516, 3
          %s519 = smul.addr %s518, 16
          %s520 = smul.addr %s519, 4
          %s521 = scalar_lea.vmem %s15, %s520
          %s522 = sshra.s32 %s43, 7
          %s523 = sand.u32 %s43, 127
          %s524 = sadd.s32 %s522, %s42
          %s525 = smul.u32 %s524, 128
          %s526 = sshra.s32 %s43, 7
          %s527 = sand.u32 %s43, 127
          %s528 = sadd.s32 %s525, %s527
          %s529 = sld [smem:[#allocation4 + %s528]]
        $region72: #{tpu_custom_call.1} parent=55 // pred_fallthru
          _
      $region56: #{tpu_custom_call.1} parent=5 // pred_fallthru
        _
      %p530 = scmp.le.s32.totalorder 1, %s35
      %p531 = scmp.lt.s32.totalorder %s35, 9
      %p532 = pnand %p530, %p531
      %p533 = pneg %p532
      // Predicated region
      $region73: #{tpu_custom_call.1} parent=5 // pred_check
        _
      $region74: #{tpu_custom_call.1} parent=5 // pred_check_branch
        %535 = sbr.rel (%p532) target = $region76
      $region75: #{tpu_custom_call.1} parent=5 // pred_region
        %s536 = ssub.s32 %s35, 1
        %p537 = scmp.lt.s32.totalorder %s44, 1
        %s538 = scalar_select %p537, %s44, 1
        %s539 = smul.addr %s538, 8
        %s540 = scalar_lea.vmem %s2, %s539
        %p541 = pneg %p73
        %p542 = pneg %p70
        %p543 = scmp.lt.s32.totalorder %s44, 1
        %s544 = scalar_select %p543, %s44, 1
        %s545 = smul.addr %s544, 8
        %s546 = scalar_lea.vmem %s3, %s545
        %p547 = pneg %p99
        %p548 = pneg %p96
        %p549 = pneg %p120
        %p550 = pneg %p117
        %p551 = pneg %p141
        %p552 = pneg %p138
        %p553 = pneg %p162
        %p554 = pneg %p159
        %p555 = pneg %p183
        %p556 = pneg %p180
        %p557 = pneg %p204
        %p558 = pneg %p201
        %p559 = pneg %p225
        %p560 = pneg %p222
        %p561 = pneg %p246
        %p562 = pneg %p243
        %p563 = pneg %p267
        %p564 = pneg %p264
        %p565 = pneg %p288
        %p566 = pneg %p285
        %p567 = pneg %p309
        %p568 = pneg %p306
        %s569 = sshra.s32 %s45, 7
        %s570 = sand.u32 %s45, 127
        %s571 = sadd.s32 %s569, %s44
        %s572 = smul.u32 %s571, 128
        %s573 = sshra.s32 %s45, 7
        %s574 = sand.u32 %s45, 127
        %s575 = sadd.s32 %s572, %s574
        %s576 = sld [smem:[#allocation4 + %s575]]
        %p577 = scmp.lt.s32.totalorder %s576, 3
        %s578 = scalar_select %p577, %s576, 3
        %s579 = smul.addr %s578, 4
        %s580 = smul.addr %s579, 4
        %s581 = scalar_lea.vmem %s14, %s580
        %p582 = pneg %p351
        %p583 = pneg %p348
        %s584 = sshra.s32 %s45, 7
        %s585 = sand.u32 %s45, 127
        %s586 = sadd.s32 %s584, %s44
        %s587 = smul.u32 %s586, 128
        %s588 = sshra.s32 %s45, 7
        %s589 = sand.u32 %s45, 127
        %s590 = sadd.s32 %s587, %s589
        %s591 = sld [smem:[#allocation4 + %s590]]
        %p592 = scmp.lt.s32.totalorder %s591, 3
        %s593 = scalar_select %p592, %s591, 3
        %s594 = smul.addr %s593, 16
        %s595 = smul.addr %s594, 4
        %s596 = scalar_lea.vmem %s15, %s595
        %p597 = pneg %p393
        %p598 = pneg %p390
        %p599 = pneg %p419
        %p600 = pneg %p416
        %s601 = sand.u32 %s406, 1
        %s602 = scalar_lea.sflag [#allocation7], %s601
        %s603 = sand.u32 %s406, 1
        %s604 = smul.addr %s603, 8
        %s605 = scalar_lea.vmem [#allocation6], %s604
        %p606 = scmp.lt.s32.totalorder %s44, 1
        %s607 = scalar_select %p606, %s44, 1
        %s608 = smul.addr %s607, 8
        %s609 = scalar_lea.vmem %s2, %s608
        %p610 = scmp.lt.s32.totalorder %s44, 1
        %s611 = scalar_select %p610, %s44, 1
        %s612 = smul.addr %s611, 8
        %s613 = scalar_lea.vmem %s3, %s612
        %s614 = sshra.s32 %s45, 7
        %s615 = sand.u32 %s45, 127
        %s616 = sadd.s32 %s614, %s44
        %s617 = smul.u32 %s616, 128
        %s618 = sshra.s32 %s45, 7
        %s619 = sand.u32 %s45, 127
        %s620 = sadd.s32 %s617, %s619
        %s621 = sld [smem:[#allocation4 + %s620]]
        %p622 = scmp.lt.s32.totalorder %s621, 3
        %s623 = scalar_select %p622, %s621, 3
        %s624 = smul.addr %s623, 4
        %s625 = smul.addr %s624, 4
        %s626 = scalar_lea.vmem %s14, %s625
        %s627 = sshra.s32 %s45, 7
        %s628 = sand.u32 %s45, 127
        %s629 = sadd.s32 %s627, %s44
        %s630 = smul.u32 %s629, 128
        %s631 = sshra.s32 %s45, 7
        %s632 = sand.u32 %s45, 127
        %s633 = sadd.s32 %s630, %s632
        %s634 = sld [smem:[#allocation4 + %s633]]
        %s635 = sshra.s32 %s45, 7
        %s636 = sand.u32 %s45, 127
        %s637 = sadd.s32 %s635, %s44
        %s638 = smul.u32 %s637, 128
        %s639 = sshra.s32 %s45, 7
        %s640 = sand.u32 %s45, 127
        %s641 = sadd.s32 %s638, %s640
        %s642 = sld [smem:[#allocation4 + %s641]]
        %p643 = scmp.lt.s32.totalorder %s642, 3
        %s644 = scalar_select %p643, %s642, 3
        %s645 = smul.addr %s644, 16
        %s646 = smul.addr %s645, 4
        %s647 = scalar_lea.vmem %s15, %s646
        %s648 = sshra.s32 %s45, 7
        %s649 = sand.u32 %s45, 127
        %s650 = sadd.s32 %s648, %s44
        %s651 = smul.u32 %s650, 128
        %s652 = sshra.s32 %s45, 7
        %s653 = sand.u32 %s45, 127
        %s654 = sadd.s32 %s651, %s653
        %s655 = sld [smem:[#allocation4 + %s654]]
        %p657 = scmp.eq.s32.totalorder %s45, 0
        // Predicated region
        $region77: #{tpu_custom_call.1} parent=75 // pred_check
          %p658 = pneg %p657
        $region78: #{tpu_custom_call.1} parent=75 // pred_check_branch
          %660 = sbr.rel (%p658) target = $region80
        $region79: #{tpu_custom_call.1} parent=75 // pred_region
          %v661 = vld [vmem:[%s609] sm:$0xff]
          %v662 = vld [vmem:[%s4] sm:$0x1]
          %v663 = vmul.f32 %v661, %v661
          %vm664 = vcmask 261120
          %v665 = vsel %vm664, %v663, 0.0
          %666 = vadd.xlane.f32.xlu0 %v665
          %v667 = vpop.xlane.xlu0 %666
          %v668 = vrcp.pop 32.0
          %v669 = vmul.f32 %v667, %v668
          %v670 = vadd.f32 %v669, 1e-06
          %v671 = vrsqrt.pop %v670
          %v672 = vmul.f32 %v661, %v671
          %v674 = vlaneseq
          %v675 = vshrl.u32 %v674, 7
          %v676 = vsub.s32 0, %v675
          %v677 = vrot.slane %v662, %v676
          %v679 = vmul.f32 %v672, %v677
          %v680 = vpack.c.bf16 %v679, %v679
          %v681 = vld [vmem:[%s6] sm:$0xff]
          %v682 = vld [vmem:[%s7] sm:$0xff]
          %v683 = vld [vmem:[%s8] sm:$0xf]
          %v684 = vld [vmem:[%s8 + $0x4] sm:$0xf]
          %v685 = vld [vmem:[%s8 + $0x8] sm:$0xf]
          %v686 = vld [vmem:[%s8 + $0xc] sm:$0xf]
          %v691 = vunpack.c.l.b16 %v683
          %v692 = vunpack.c.l.b16 %v684
          %v693 = vunpack.c.l.b16 %v685
          %v694 = vunpack.c.l.b16 %v686
          %v695 = vpack.c.b16 %v692, %v691
          %v696 = vpack.c.b16 %v694, %v693
          %v700 = vsel %vm664, %v680, 0
          %702 = vmatprep.subr.bf16.mxu0 0
          %703 = vmatpush1.bf16.msra.mxu0 %v695
          %704 = vmatprep.subr.bf16.mxu0 0
          %705 = vmatpush1.bf16.msra.mxu0 %v696
          %706 = vmatprep.subr.bf16.mxu0 0
          %707 = vmatpush1.bf16.msra.mxu0 0
          %708 = vmatprep.subr.bf16.mxu0 0
          %709 = vmatpush1.bf16.msra.mxu0 0
          %710 = vmatprep.subr.bf16.mxu0 0
          %711 = vmatpush1.bf16.msra.mxu0 0
          %712 = vmatprep.subr.bf16.mxu0 0
          %713 = vmatpush1.bf16.msra.mxu0 0
          %714 = vmatprep.subr.bf16.mxu0 0
          %715 = vmatpush1.bf16.msra.mxu0 0
          %716 = vmatprep.subr.bf16.mxu0 0
          %717 = vmatpush1.bf16.msra.mxu0 0
          %718 = vmatprep.subr.bf16.mxu0 0
          %719 = vmatpush1.bf16.msra.mxu0 0
          %720 = vmatprep.subr.bf16.mxu0 0
          %721 = vmatpush1.bf16.msra.mxu0 0
          %722 = vmatprep.subr.bf16.mxu0 0
          %723 = vmatpush1.bf16.msra.mxu0 0
          %724 = vmatprep.subr.bf16.mxu0 0
          %725 = vmatpush1.bf16.msra.mxu0 0
          %726 = vmatprep.subr.bf16.mxu0 0
          %727 = vmatpush1.bf16.msra.mxu0 0
          %728 = vmatprep.subr.bf16.mxu0 0
          %729 = vmatpush1.bf16.msra.mxu0 0
          %730 = vmatprep.subr.bf16.mxu0 0
          %731 = vmatpush1.bf16.msra.mxu0 0
          %732 = vmatprep.subr.bf16.mxu0 0
          %733 = vmatpush1.bf16.msra.mxu0 0
          %734 = vmatprep.mubr.bf16.mxu0 0
          %735 = vmatmul.mubr.bf16.gmra.mrb[0].mxu0 %v700
          %v736 = vpop.f32.mrb[0].mxu0
          %v737 = vadd.f32 0.0, %v736
          %v738 = vpop.f32.mrb[0].mxu0
          %v739 = vpop.f32.mrb[0].mxu0
          %v740 = vpop.f32.mrb[0].mxu0
          %741 = vdwg.mxu0
          %v742 = vmul.f32 %v737, %v681
          %v743 = vld [vmem:[%s9] sm:$0xf]
          %v744 = vld [vmem:[%s9 + $0x4] sm:$0xf]
          %v745 = vld [vmem:[%s9 + $0x8] sm:$0xf]
          %v746 = vld [vmem:[%s9 + $0xc] sm:$0xf]
          %v751 = vunpack.c.l.b16 %v743
          %v752 = vunpack.c.l.b16 %v744
          %v753 = vunpack.c.l.b16 %v745
          %v754 = vunpack.c.l.b16 %v746
          %v755 = vpack.c.b16 %v752, %v751
          %v756 = vpack.c.b16 %v754, %v753
          %759 = vmatprep.subr.bf16.mxu0 0
          %760 = vmatpush1.bf16.msra.mxu0 %v755
          %761 = vmatprep.subr.bf16.mxu0 0
          %762 = vmatpush1.bf16.msra.mxu0 %v756
          %763 = vmatprep.subr.bf16.mxu0 0
          %764 = vmatpush1.bf16.msra.mxu0 0
          %765 = vmatprep.subr.bf16.mxu0 0
          %766 = vmatpush1.bf16.msra.mxu0 0
          %767 = vmatprep.subr.bf16.mxu0 0
          %768 = vmatpush1.bf16.msra.mxu0 0
          %769 = vmatprep.subr.bf16.mxu0 0
          %770 = vmatpush1.bf16.msra.mxu0 0
          %771 = vmatprep.subr.bf16.mxu0 0
          %772 = vmatpush1.bf16.msra.mxu0 0
          %773 = vmatprep.subr.bf16.mxu0 0
          %774 = vmatpush1.bf16.msra.mxu0 0
          %775 = vmatprep.subr.bf16.mxu0 0
          %776 = vmatpush1.bf16.msra.mxu0 0
          %777 = vmatprep.subr.bf16.mxu0 0
          %778 = vmatpush1.bf16.msra.mxu0 0
          %779 = vmatprep.subr.bf16.mxu0 0
          %780 = vmatpush1.bf16.msra.mxu0 0
          %781 = vmatprep.subr.bf16.mxu0 0
          %782 = vmatpush1.bf16.msra.mxu0 0
          %783 = vmatprep.subr.bf16.mxu0 0
          %784 = vmatpush1.bf16.msra.mxu0 0
          %785 = vmatprep.subr.bf16.mxu0 0
          %786 = vmatpush1.bf16.msra.mxu0 0
          %787 = vmatprep.subr.bf16.mxu0 0
          %788 = vmatpush1.bf16.msra.mxu0 0
          %789 = vmatprep.subr.bf16.mxu0 0
          %790 = vmatpush1.bf16.msra.mxu0 0
          %791 = vmatprep.mubr.bf16.mxu0 0
          %792 = vmatmul.mubr.bf16.gmra.mrb[0].mxu0 %v700
          %v793 = vpop.f32.mrb[0].mxu0
          %v794 = vadd.f32 0.0, %v793
          %v795 = vpop.f32.mrb[0].mxu0
          %v796 = vpop.f32.mrb[0].mxu0
          %v797 = vpop.f32.mrb[0].mxu0
          %798 = vdwg.mxu0
          %v799 = vmul.f32 %v794, %v682
          %v800 = vadd.f32 %v742, %v799
          %v801 = vld [vmem:[%s10] sm:$0xf]
          %v802 = vld [vmem:[%s10 + $0x4] sm:$0xf]
          %v803 = vld [vmem:[%s10 + $0x8] sm:$0xf]
          %v804 = vld [vmem:[%s10 + $0xc] sm:$0xf]
          %v809 = vunpack.c.l.b16 %v801
          %v810 = vunpack.c.l.b16 %v802
          %v811 = vunpack.c.l.b16 %v803
          %v812 = vunpack.c.l.b16 %v804
          %v813 = vpack.c.b16 %v810, %v809
          %v814 = vpack.c.b16 %v812, %v811
          %817 = vmatprep.subr.bf16.mxu0 0
          %818 = vmatpush1.bf16.msra.mxu0 %v813
          %819 = vmatprep.subr.bf16.mxu0 0
          %820 = vmatpush1.bf16.msra.mxu0 %v814
          %821 = vmatprep.subr.bf16.mxu0 0
          %822 = vmatpush1.bf16.msra.mxu0 0
          %823 = vmatprep.subr.bf16.mxu0 0
          %824 = vmatpush1.bf16.msra.mxu0 0
          %825 = vmatprep.subr.bf16.mxu0 0
          %826 = vmatpush1.bf16.msra.mxu0 0
          %827 = vmatprep.subr.bf16.mxu0 0
          %828 = vmatpush1.bf16.msra.mxu0 0
          %829 = vmatprep.subr.bf16.mxu0 0
          %830 = vmatpush1.bf16.msra.mxu0 0
          %831 = vmatprep.subr.bf16.mxu0 0
          %832 = vmatpush1.bf16.msra.mxu0 0
          %833 = vmatprep.subr.bf16.mxu0 0
          %834 = vmatpush1.bf16.msra.mxu0 0
          %835 = vmatprep.subr.bf16.mxu0 0
          %836 = vmatpush1.bf16.msra.mxu0 0
          %837 = vmatprep.subr.bf16.mxu0 0
          %838 = vmatpush1.bf16.msra.mxu0 0
          %839 = vmatprep.subr.bf16.mxu0 0
          %840 = vmatpush1.bf16.msra.mxu0 0
          %841 = vmatprep.subr.bf16.mxu0 0
          %842 = vmatpush1.bf16.msra.mxu0 0
          %843 = vmatprep.subr.bf16.mxu0 0
          %844 = vmatpush1.bf16.msra.mxu0 0
          %845 = vmatprep.subr.bf16.mxu0 0
          %846 = vmatpush1.bf16.msra.mxu0 0
          %847 = vmatprep.subr.bf16.mxu0 0
          %848 = vmatpush1.bf16.msra.mxu0 0
          %849 = vmatprep.mubr.bf16.mxu0 0
          %850 = vmatmul.mubr.bf16.gmra.mrb[0].mxu0 %v700
          %v851 = vpop.f32.mrb[0].mxu0
          %v852 = vadd.f32 0.0, %v851
          %v853 = vpop.f32.mrb[0].mxu0
          %v854 = vpop.f32.mrb[0].mxu0
          %v855 = vpop.f32.mrb[0].mxu0
          %856 = vdwg.mxu0
          %v857 = vmul.f32 %v852, %v681
          %v858 = vld [vmem:[%s11] sm:$0xf]
          %v859 = vld [vmem:[%s11 + $0x4] sm:$0xf]
          %v860 = vld [vmem:[%s11 + $0x8] sm:$0xf]
          %v861 = vld [vmem:[%s11 + $0xc] sm:$0xf]
          %v866 = vunpack.c.l.b16 %v858
          %v867 = vunpack.c.l.b16 %v859
          %v868 = vunpack.c.l.b16 %v860
          %v869 = vunpack.c.l.b16 %v861
          %v870 = vpack.c.b16 %v867, %v866
          %v871 = vpack.c.b16 %v869, %v868
          %874 = vmatprep.subr.bf16.mxu0 0
          %875 = vmatpush1.bf16.msra.mxu0 %v870
          %876 = vmatprep.subr.bf16.mxu0 0
          %877 = vmatpush1.bf16.msra.mxu0 %v871
          %878 = vmatprep.subr.bf16.mxu0 0
          %879 = vmatpush1.bf16.msra.mxu0 0
          %880 = vmatprep.subr.bf16.mxu0 0
          %881 = vmatpush1.bf16.msra.mxu0 0
          %882 = vmatprep.subr.bf16.mxu0 0
          %883 = vmatpush1.bf16.msra.mxu0 0
          %884 = vmatprep.subr.bf16.mxu0 0
          %885 = vmatpush1.bf16.msra.mxu0 0
          %886 = vmatprep.subr.bf16.mxu0 0
          %887 = vmatpush1.bf16.msra.mxu0 0
          %888 = vmatprep.subr.bf16.mxu0 0
          %889 = vmatpush1.bf16.msra.mxu0 0
          %890 = vmatprep.subr.bf16.mxu0 0
          %891 = vmatpush1.bf16.msra.mxu0 0
          %892 = vmatprep.subr.bf16.mxu0 0
          %893 = vmatpush1.bf16.msra.mxu0 0
          %894 = vmatprep.subr.bf16.mxu0 0
          %895 = vmatpush1.bf16.msra.mxu0 0
          %896 = vmatprep.subr.bf16.mxu0 0
          %897 = vmatpush1.bf16.msra.mxu0 0
          %898 = vmatprep.subr.bf16.mxu0 0
          %899 = vmatpush1.bf16.msra.mxu0 0
          %900 = vmatprep.subr.bf16.mxu0 0
          %901 = vmatpush1.bf16.msra.mxu0 0
          %902 = vmatprep.subr.bf16.mxu0 0
          %903 = vmatpush1.bf16.msra.mxu0 0
          %904 = vmatprep.subr.bf16.mxu0 0
          %905 = vmatpush1.bf16.msra.mxu0 0
          %906 = vmatprep.mubr.bf16.mxu0 0
          %907 = vmatmul.mubr.bf16.gmra.mrb[0].mxu0 %v700
          %v908 = vpop.f32.mrb[0].mxu0
          %v909 = vadd.f32 0.0, %v908
          %v910 = vpop.f32.mrb[0].mxu0
          %v911 = vpop.f32.mrb[0].mxu0
          %v912 = vpop.f32.mrb[0].mxu0
          %913 = vdwg.mxu0
          %v914 = vmul.f32 %v909, %v682
          %v915 = vadd.f32 %v857, %v914
          %v916 = vld [vmem:[%s12] sm:$0xf]
          %v917 = vld [vmem:[%s12 + $0x4] sm:$0xf]
          %v918 = vld [vmem:[%s12 + $0x8] sm:$0xf]
          %v919 = vld [vmem:[%s12 + $0xc] sm:$0xf]
          %v924 = vunpack.c.l.b16 %v916
          %v925 = vunpack.c.l.b16 %v917
          %v926 = vunpack.c.l.b16 %v918
          %v927 = vunpack.c.l.b16 %v919
          %v928 = vpack.c.b16 %v925, %v924
          %v929 = vpack.c.b16 %v927, %v926
          %932 = vmatprep.subr.bf16.mxu0 0
          %933 = vmatpush1.bf16.msra.mxu0 %v928
          %934 = vmatprep.subr.bf16.mxu0 0
          %935 = vmatpush1.bf16.msra.mxu0 %v929
          %936 = vmatprep.subr.bf16.mxu0 0
          %937 = vmatpush1.bf16.msra.mxu0 0
          %938 = vmatprep.subr.bf16.mxu0 0
          %939 = vmatpush1.bf16.msra.mxu0 0
          %940 = vmatprep.subr.bf16.mxu0 0
          %941 = vmatpush1.bf16.msra.mxu0 0
          %942 = vmatprep.subr.bf16.mxu0 0
          %943 = vmatpush1.bf16.msra.mxu0 0
          %944 = vmatprep.subr.bf16.mxu0 0
          %945 = vmatpush1.bf16.msra.mxu0 0
          %946 = vmatprep.subr.bf16.mxu0 0
          %947 = vmatpush1.bf16.msra.mxu0 0
          %948 = vmatprep.subr.bf16.mxu0 0
          %949 = vmatpush1.bf16.msra.mxu0 0
          %950 = vmatprep.subr.bf16.mxu0 0
          %951 = vmatpush1.bf16.msra.mxu0 0
          %952 = vmatprep.subr.bf16.mxu0 0
          %953 = vmatpush1.bf16.msra.mxu0 0
          %954 = vmatprep.subr.bf16.mxu0 0
          %955 = vmatpush1.bf16.msra.mxu0 0
          %956 = vmatprep.subr.bf16.mxu0 0
          %957 = vmatpush1.bf16.msra.mxu0 0
          %958 = vmatprep.subr.bf16.mxu0 0
          %959 = vmatpush1.bf16.msra.mxu0 0
          %960 = vmatprep.subr.bf16.mxu0 0
          %961 = vmatpush1.bf16.msra.mxu0 0
          %962 = vmatprep.subr.bf16.mxu0 0
          %963 = vmatpush1.bf16.msra.mxu0 0
          %964 = vmatprep.mubr.bf16.mxu0 0
          %965 = vmatmul.mubr.bf16.gmra.mrb[0].mxu0 %v700
          %v966 = vpop.f32.mrb[0].mxu0
          %v967 = vadd.f32 0.0, %v966
          %v968 = vpop.f32.mrb[0].mxu0
          %v969 = vpop.f32.mrb[0].mxu0
          %v970 = vpop.f32.mrb[0].mxu0
          %971 = vdwg.mxu0
          %v972 = vmul.f32 %v800, 0.35355338
          %v973 = vpack.c.bf16 %v972, %v972
          %v974 = vpack.c.bf16 %v915, %v915
          %v975 = vpack.c.bf16 %v967, %v967
          %v976 = vld [vmem:[%s13] sm:$0xf]
          %v977 = vld [vmem:[%s13 + $0x4] sm:$0xf]
          %v978 = vld [vmem:[%s13 + $0x8] sm:$0xf]
          %v979 = vld [vmem:[%s13 + $0xc] sm:$0xf]
          %v980 = vlaneseq
          %v981 = vshrl.u32 %v980, 7
          %v982 = vlaneseq
          %v983 = vand.u32 %v982, 127
          %vm984 = vcmp.le.s32.totalorder %v983, %v981
          %vm985 = vcmask 64512
          %v987 = vsel %vm985, %v973, 0
          %v990 = vsel %vm985, %v974, 0
          %992 = vmatprep.subr.bf16.mxu0 0
          %993 = vmatpush1.bf16.xpose.msra.mxu0 %v990
          %994 = vmatprep.subr.bf16.mxu0 0
          %995 = vmatpush1.bf16.xpose.msra.mxu0 0
          %996 = vmatprep.subr.bf16.mxu0 0
          %997 = vmatpush1.bf16.xpose.msra.mxu0 0
          %998 = vmatprep.subr.bf16.mxu0 0
          %999 = vmatpush1.bf16.xpose.msra.mxu0 0
          %1000 = vmatprep.subr.bf16.mxu0 0
          %1001 = vmatpush1.bf16.xpose.msra.mxu0 0
          %1002 = vmatprep.subr.bf16.mxu0 0
          %1003 = vmatpush1.bf16.xpose.msra.mxu0 0
          %1004 = vmatprep.subr.bf16.mxu0 0
          %1005 = vmatpush1.bf16.xpose.msra.mxu0 0
          %1006 = vmatprep.subr.bf16.mxu0 0
          %1007 = vmatpush1.bf16.xpose.msra.mxu0 0
          %1008 = vmatprep.subr.bf16.mxu0 0
          %1009 = vmatpush1.bf16.xpose.msra.mxu0 0
          %1010 = vmatprep.subr.bf16.mxu0 0
          %1011 = vmatpush1.bf16.xpose.msra.mxu0 0
          %1012 = vmatprep.subr.bf16.mxu0 0
          %1013 = vmatpush1.bf16.xpose.msra.mxu0 0
          %1014 = vmatprep.subr.bf16.mxu0 0
          %1015 = vmatpush1.bf16.xpose.msra.mxu0 0
          %1016 = vmatprep.subr.bf16.mxu0 0
          %1017 = vmatpush1.bf16.xpose.msra.mxu0 0
          %1018 = vmatprep.subr.bf16.mxu0 0
          %1019 = vmatpush1.bf16.xpose.msra.mxu0 0
          %1020 = vmatprep.subr.bf16.mxu0 0
          %1021 = vmatpush1.bf16.xpose.msra.mxu0 0
          %1022 = vmatprep.subr.bf16.mxu0 0
          %1023 = vmatpush1.bf16.xpose.msra.mxu0 0
          %1024 = vmatprep.mubr.bf16.mxu0 0
          %1025 = vmatmul.mubr.bf16.gmra.mrb[0].mxu0 %v987
          %v1026 = vpop.f32.mrb[0].mxu0
          %v1027 = vadd.f32 0.0, %v1026
          %v1028 = vpop.f32.mrb[0].mxu0
          %v1029 = vpop.f32.mrb[0].mxu0
          %v1030 = vpop.f32.mrb[0].mxu0
          %1031 = vdwg.mxu0
          %v1032 = vsel %vm984, %v1027, -1e+30
          %v1033 = vsel %vm985, %v1032, -inf
          %1034 = vmax.xlane.f32.xlu0 %v1033
          %v1035 = vpop.xlane.xlu0 %1034
          %v1036 = vsub.f32 %v1032, %v1035
          %v1037 = vmul.f32 %v1036, 1.442695
          %v1038 = vpow.pop %v1037
          %v1039 = vsel %vm985, %v1038, 0.0
          %1040 = vadd.xlane.f32.xlu0 %v1039
          %v1041 = vpop.xlane.xlu0 %1040
          %v1042 = vrcp.pop %v1041
          %v1043 = vmul.f32 %v1038, %v1042
          %v1044 = vpack.c.bf16 %v1043, %v1043
          %v1046 = vsel %vm985, %v1044, 0
          %vm1048 = vcmask 1043456
          %v1050 = vsel %vm1048, %v975, 0
          %1052 = vmatprep.subr.bf16.mxu0 0
          %1053 = vmatpush1.bf16.msra.mxu0 %v1050
          %1054 = vmatprep.subr.bf16.mxu0 0
          %1055 = vmatpush1.bf16.msra.mxu0 0
          %1056 = vmatprep.subr.bf16.mxu0 0
          %1057 = vmatpush1.bf16.msra.mxu0 0
          %1058 = vmatprep.subr.bf16.mxu0 0
          %1059 = vmatpush1.bf16.msra.mxu0 0
          %1060 = vmatprep.subr.bf16.mxu0 0
          %1061 = vmatpush1.bf16.msra.mxu0 0
          %1062 = vmatprep.subr.bf16.mxu0 0
          %1063 = vmatpush1.bf16.msra.mxu0 0
          %1064 = vmatprep.subr.bf16.mxu0 0
          %1065 = vmatpush1.bf16.msra.mxu0 0
          %1066 = vmatprep.subr.bf16.mxu0 0
          %1067 = vmatpush1.bf16.msra.mxu0 0
          %1068 = vmatprep.subr.bf16.mxu0 0
          %1069 = vmatpush1.bf16.msra.mxu0 0
          %1070 = vmatprep.subr.bf16.mxu0 0
          %1071 = vmatpush1.bf16.msra.mxu0 0
          %1072 = vmatprep.subr.bf16.mxu0 0
          %1073 = vmatpush1.bf16.msra.mxu0 0
          %1074 = vmatprep.subr.bf16.mxu0 0
          %1075 = vmatpush1.bf16.msra.mxu0 0
          %1076 = vmatprep.subr.bf16.mxu0 0
          %1077 = vmatpush1.bf16.msra.mxu0 0
          %1078 = vmatprep.subr.bf16.mxu0 0
          %1079 = vmatpush1.bf16.msra.mxu0 0
          %1080 = vmatprep.subr.bf16.mxu0 0
          %1081 = vmatpush1.bf16.msra.mxu0 0
          %1082 = vmatprep.subr.bf16.mxu0 0
          %1083 = vmatpush1.bf16.msra.mxu0 0
          %1084 = vmatprep.mubr.bf16.mxu0 0
          %1085 = vmatmul.mubr.bf16.gmra.mrb[0].mxu0 %v1046
          %v1086 = vpop.f32.mrb[0].mxu0
          %v1087 = vadd.f32 0.0, %v1086
          %v1088 = vpop.f32.mrb[0].mxu0
          %v1089 = vpop.f32.mrb[0].mxu0
          %v1090 = vpop.f32.mrb[0].mxu0
          %1091 = vdwg.mxu0
          %v1092 = vpack.c.bf16 %v1087, %v1087
          %1094 = vrot.lane.b32.xlu0 %v973, 120
          %v1095 = vpop.permute.xlu0 %1094
          %1097 = vrot.lane.b32.xlu0 %v974, 120
          %v1098 = vpop.permute.xlu0 %1097
          %v1100 = vsel %vm985, %v1095, 0
          %v1103 = vsel %vm985, %v1098, 0
          %1105 = vmatprep.subr.bf16.mxu0 0
          %1106 = vmatpush1.bf16.xpose.msra.mxu0 %v1103
          %1107 = vmatprep.subr.bf16.mxu0 0
          %1108 = vmatpush1.bf16.xpose.msra.mxu0 0
          %1109 = vmatprep.subr.bf16.mxu0 0
          %1110 = vmatpush1.bf16.xpose.msra.mxu0 0
          %1111 = vmatprep.subr.bf16.mxu0 0
          %1112 = vmatpush1.bf16.xpose.msra.mxu0 0
          %1113 = vmatprep.subr.bf16.mxu0 0
          %1114 = vmatpush1.bf16.xpose.msra.mxu0 0
          %1115 = vmatprep.subr.bf16.mxu0 0
          %1116 = vmatpush1.bf16.xpose.msra.mxu0 0
          %1117 = vmatprep.subr.bf16.mxu0 0
          %1118 = vmatpush1.bf16.xpose.msra.mxu0 0
          %1119 = vmatprep.subr.bf16.mxu0 0
          %1120 = vmatpush1.bf16.xpose.msra.mxu0 0
          %1121 = vmatprep.subr.bf16.mxu0 0
          %1122 = vmatpush1.bf16.xpose.msra.mxu0 0
          %1123 = vmatprep.subr.bf16.mxu0 0
          %1124 = vmatpush1.bf16.xpose.msra.mxu0 0
          %1125 = vmatprep.subr.bf16.mxu0 0
          %1126 = vmatpush1.bf16.xpose.msra.mxu0 0
          %1127 = vmatprep.subr.bf16.mxu0 0
          %1128 = vmatpush1.bf16.xpose.msra.mxu0 0
          %1129 = vmatprep.subr.bf16.mxu0 0
          %1130 = vmatpush1.bf16.xpose.msra.mxu0 0
          %1131 = vmatprep.subr.bf16.mxu0 0
          %1132 = vmatpush1.bf16.xpose.msra.mxu0 0
          %1133 = vmatprep.subr.bf16.mxu0 0
          %1134 = vmatpush1.bf16.xpose.msra.mxu0 0
          %1135 = vmatprep.subr.bf16.mxu0 0
          %1136 = vmatpush1.bf16.xpose.msra.mxu0 0
          %1137 = vmatprep.mubr.bf16.mxu0 0
          %1138 = vmatmul.mubr.bf16.gmra.mrb[0].mxu0 %v1100
          %v1139 = vpop.f32.mrb[0].mxu0
          %v1140 = vadd.f32 0.0, %v1139
          %v1141 = vpop.f32.mrb[0].mxu0
          %v1142 = vpop.f32.mrb[0].mxu0
          %v1143 = vpop.f32.mrb[0].mxu0
          %1144 = vdwg.mxu0
          %v1145 = vsel %vm984, %v1140, -1e+30
          %v1146 = vsel %vm985, %v1145, -inf
          %1147 = vmax.xlane.f32.xlu0 %v1146
          %v1148 = vpop.xlane.xlu0 %1147
          %v1149 = vsub.f32 %v1145, %v1148
          %v1150 = vmul.f32 %v1149, 1.442695
          %v1151 = vpow.pop %v1150
          %v1152 = vsel %vm985, %v1151, 0.0
          %1153 = vadd.xlane.f32.xlu0 %v1152
          %v1154 = vpop.xlane.xlu0 %1153
          %v1155 = vrcp.pop %v1154
          %v1156 = vmul.f32 %v1151, %v1155
          %v1157 = vpack.c.bf16 %v1156, %v1156
          %1159 = vrot.lane.b32.xlu0 %v975, 120
          %v1160 = vpop.permute.xlu0 %1159
          %v1162 = vsel %vm985, %v1157, 0
          %v1165 = vsel %vm1048, %v1160, 0
          %1167 = vmatprep.subr.bf16.mxu0 0
          %1168 = vmatpush1.bf16.msra.mxu0 %v1165
          %1169 = vmatprep.subr.bf16.mxu0 0
          %1170 = vmatpush1.bf16.msra.mxu0 0
          %1171 = vmatprep.subr.bf16.mxu0 0
          %1172 = vmatpush1.bf16.msra.mxu0 0
          %1173 = vmatprep.subr.bf16.mxu0 0
          %1174 = vmatpush1.bf16.msra.mxu0 0
          %1175 = vmatprep.subr.bf16.mxu0 0
          %1176 = vmatpush1.bf16.msra.mxu0 0
          %1177 = vmatprep.subr.bf16.mxu0 0
          %1178 = vmatpush1.bf16.msra.mxu0 0
          %1179 = vmatprep.subr.bf16.mxu0 0
          %1180 = vmatpush1.bf16.msra.mxu0 0
          %1181 = vmatprep.subr.bf16.mxu0 0
          %1182 = vmatpush1.bf16.msra.mxu0 0
          %1183 = vmatprep.subr.bf16.mxu0 0
          %1184 = vmatpush1.bf16.msra.mxu0 0
          %1185 = vmatprep.subr.bf16.mxu0 0
          %1186 = vmatpush1.bf16.msra.mxu0 0
          %1187 = vmatprep.subr.bf16.mxu0 0
          %1188 = vmatpush1.bf16.msra.mxu0 0
          %1189 = vmatprep.subr.bf16.mxu0 0
          %1190 = vmatpush1.bf16.msra.mxu0 0
          %1191 = vmatprep.subr.bf16.mxu0 0
          %1192 = vmatpush1.bf16.msra.mxu0 0
          %1193 = vmatprep.subr.bf16.mxu0 0
          %1194 = vmatpush1.bf16.msra.mxu0 0
          %1195 = vmatprep.subr.bf16.mxu0 0
          %1196 = vmatpush1.bf16.msra.mxu0 0
          %1197 = vmatprep.subr.bf16.mxu0 0
          %1198 = vmatpush1.bf16.msra.mxu0 0
          %1199 = vmatprep.mubr.bf16.mxu0 0
          %1200 = vmatmul.mubr.bf16.gmra.mrb[0].mxu0 %v1162
          %v1201 = vpop.f32.mrb[0].mxu0
          %v1202 = vadd.f32 0.0, %v1201
          %v1203 = vpop.f32.mrb[0].mxu0
          %v1204 = vpop.f32.mrb[0].mxu0
          %v1205 = vpop.f32.mrb[0].mxu0
          %1206 = vdwg.mxu0
          %v1207 = vpack.c.bf16 %v1202, %v1202
          %v1209 = vsel %vm985, %v1207, 0
          %v1212 = vsel %vm1048, %v977, 0
          %1214 = vmatprep.subr.bf16.mxu0 0
          %1215 = vmatpush1.bf16.msra.mxu0 %v1212
          %1216 = vmatprep.subr.bf16.mxu0 0
          %1217 = vmatpush1.bf16.msra.mxu0 0
          %1218 = vmatprep.subr.bf16.mxu0 0
          %1219 = vmatpush1.bf16.msra.mxu0 0
          %1220 = vmatprep.subr.bf16.mxu0 0
          %1221 = vmatpush1.bf16.msra.mxu0 0
          %1222 = vmatprep.subr.bf16.mxu0 0
          %1223 = vmatpush1.bf16.msra.mxu0 0
          %1224 = vmatprep.subr.bf16.mxu0 0
          %1225 = vmatpush1.bf16.msra.mxu0 0
          %1226 = vmatprep.subr.bf16.mxu0 0
          %1227 = vmatpush1.bf16.msra.mxu0 0
          %1228 = vmatprep.subr.bf16.mxu0 0
          %1229 = vmatpush1.bf16.msra.mxu0 0
          %1230 = vmatprep.subr.bf16.mxu0 0
          %1231 = vmatpush1.bf16.msra.mxu0 0
          %1232 = vmatprep.subr.bf16.mxu0 0
          %1233 = vmatpush1.bf16.msra.mxu0 0
          %1234 = vmatprep.subr.bf16.mxu0 0
          %1235 = vmatpush1.bf16.msra.mxu0 0
          %1236 = vmatprep.subr.bf16.mxu0 0
          %1237 = vmatpush1.bf16.msra.mxu0 0
          %1238 = vmatprep.subr.bf16.mxu0 0
          %1239 = vmatpush1.bf16.msra.mxu0 0
          %1240 = vmatprep.subr.bf16.mxu0 0
          %1241 = vmatpush1.bf16.msra.mxu0 0
          %1242 = vmatprep.subr.bf16.mxu0 0
          %1243 = vmatpush1.bf16.msra.mxu0 0
          %1244 = vmatprep.subr.bf16.mxu0 0
          %1245 = vmatpush1.bf16.msra.mxu0 0
          %1246 = vmatprep.mubr.bf16.mxu0 0
          %1247 = vmatmul.mubr.bf16.gmra.mrb[0].mxu0 %v1209
          %v1248 = vpop.f32.mrb[0].mxu0
          %v1249 = vadd.f32 0.0, %v1248
          %v1250 = vpop.f32.mrb[0].mxu0
          %v1251 = vpop.f32.mrb[0].mxu0
          %v1252 = vpop.f32.mrb[0].mxu0
          %1253 = vdwg.mxu0
          %v1255 = vsel %vm985, %v1092, 0
          %v1258 = vsel %vm1048, %v976, 0
          %1260 = vmatprep.subr.bf16.mxu0 0
          %1261 = vmatpush1.bf16.msra.mxu0 %v1258
          %1262 = vmatprep.subr.bf16.mxu0 0
          %1263 = vmatpush1.bf16.msra.mxu0 0
          %1264 = vmatprep.subr.bf16.mxu0 0
          %1265 = vmatpush1.bf16.msra.mxu0 0
          %1266 = vmatprep.subr.bf16.mxu0 0
          %1267 = vmatpush1.bf16.msra.mxu0 0
          %1268 = vmatprep.subr.bf16.mxu0 0
          %1269 = vmatpush1.bf16.msra.mxu0 0
          %1270 = vmatprep.subr.bf16.mxu0 0
          %1271 = vmatpush1.bf16.msra.mxu0 0
          %1272 = vmatprep.subr.bf16.mxu0 0
          %1273 = vmatpush1.bf16.msra.mxu0 0
          %1274 = vmatprep.subr.bf16.mxu0 0
          %1275 = vmatpush1.bf16.msra.mxu0 0
          %1276 = vmatprep.subr.bf16.mxu0 0
          %1277 = vmatpush1.bf16.msra.mxu0 0
          %1278 = vmatprep.subr.bf16.mxu0 0
          %1279 = vmatpush1.bf16.msra.mxu0 0
          %1280 = vmatprep.subr.bf16.mxu0 0
          %1281 = vmatpush1.bf16.msra.mxu0 0
          %1282 = vmatprep.subr.bf16.mxu0 0
          %1283 = vmatpush1.bf16.msra.mxu0 0
          %1284 = vmatprep.subr.bf16.mxu0 0
          %1285 = vmatpush1.bf16.msra.mxu0 0
          %1286 = vmatprep.subr.bf16.mxu0 0
          %1287 = vmatpush1.bf16.msra.mxu0 0
          %1288 = vmatprep.subr.bf16.mxu0 0
          %1289 = vmatpush1.bf16.msra.mxu0 0
          %1290 = vmatprep.subr.bf16.mxu0 0
          %1291 = vmatpush1.bf16.msra.mxu0 0
          %1292 = vmatprep.mubr.bf16.mxu0 0
          %1293 = vmatmul.mubr.bf16.gmra.mrb[0].mxu0 %v1255
          %v1294 = vpop.f32.mrb[0].mxu0
          %v1295 = vadd.f32 %v1249, %v1294
          %v1296 = vpop.f32.mrb[0].mxu0
          %v1297 = vpop.f32.mrb[0].mxu0
          %v1298 = vpop.f32.mrb[0].mxu0
          %1299 = vdwg.mxu0
          %1300 = vrot.lane.b32.xlu0 %v973, 112
          %v1301 = vpop.permute.xlu0 %1300
          %1302 = vrot.lane.b32.xlu0 %v974, 112
          %v1303 = vpop.permute.xlu0 %1302
          %v1305 = vsel %vm985, %v1301, 0
          %v1308 = vsel %vm985, %v1303, 0
          %1310 = vmatprep.subr.bf16.mxu0 0
          %1311 = vmatpush1.bf16.xpose.msra.mxu0 %v1308
          %1312 = vmatprep.subr.bf16.mxu0 0
          %1313 = vmatpush1.bf16.xpose.msra.mxu0 0
          %1314 = vmatprep.subr.bf16.mxu0 0
          %1315 = vmatpush1.bf16.xpose.msra.mxu0 0
          %1316 = vmatprep.subr.bf16.mxu0 0
          %1317 = vmatpush1.bf16.xpose.msra.mxu0 0
          %1318 = vmatprep.subr.bf16.mxu0 0
          %1319 = vmatpush1.bf16.xpose.msra.mxu0 0
          %1320 = vmatprep.subr.bf16.mxu0 0
          %1321 = vmatpush1.bf16.xpose.msra.mxu0 0
          %1322 = vmatprep.subr.bf16.mxu0 0
          %1323 = vmatpush1.bf16.xpose.msra.mxu0 0
          %1324 = vmatprep.subr.bf16.mxu0 0
          %1325 = vmatpush1.bf16.xpose.msra.mxu0 0
          %1326 = vmatprep.subr.bf16.mxu0 0
          %1327 = vmatpush1.bf16.xpose.msra.mxu0 0
          %1328 = vmatprep.subr.bf16.mxu0 0
          %1329 = vmatpush1.bf16.xpose.msra.mxu0 0
          %1330 = vmatprep.subr.bf16.mxu0 0
          %1331 = vmatpush1.bf16.xpose.msra.mxu0 0
          %1332 = vmatprep.subr.bf16.mxu0 0
          %1333 = vmatpush1.bf16.xpose.msra.mxu0 0
          %1334 = vmatprep.subr.bf16.mxu0 0
          %1335 = vmatpush1.bf16.xpose.msra.mxu0 0
          %1336 = vmatprep.subr.bf16.mxu0 0
          %1337 = vmatpush1.bf16.xpose.msra.mxu0 0
          %1338 = vmatprep.subr.bf16.mxu0 0
          %1339 = vmatpush1.bf16.xpose.msra.mxu0 0
          %1340 = vmatprep.subr.bf16.mxu0 0
          %1341 = vmatpush1.bf16.xpose.msra.mxu0 0
          %1342 = vmatprep.mubr.bf16.mxu0 0
          %1343 = vmatmul.mubr.bf16.gmra.mrb[0].mxu0 %v1305
          %v1344 = vpop.f32.mrb[0].mxu0
          %v1345 = vadd.f32 0.0, %v1344
          %v1346 = vpop.f32.mrb[0].mxu0
          %v1347 = vpop.f32.mrb[0].mxu0
          %v1348 = vpop.f32.mrb[0].mxu0
          %1349 = vdwg.mxu0
          %v1350 = vsel %vm984, %v1345, -1e+30
          %v1351 = vsel %vm985, %v1350, -inf
          %1352 = vmax.xlane.f32.xlu0 %v1351
          %v1353 = vpop.xlane.xlu0 %1352
          %v1354 = vsub.f32 %v1350, %v1353
          %v1355 = vmul.f32 %v1354, 1.442695
          %v1356 = vpow.pop %v1355
          %v1357 = vsel %vm985, %v1356, 0.0
          %1358 = vadd.xlane.f32.xlu0 %v1357
          %v1359 = vpop.xlane.xlu0 %1358
          %v1360 = vrcp.pop %v1359
          %v1361 = vmul.f32 %v1356, %v1360
          %v1362 = vpack.c.bf16 %v1361, %v1361
          %1363 = vrot.lane.b32.xlu0 %v975, 112
          %v1364 = vpop.permute.xlu0 %1363
          %v1366 = vsel %vm985, %v1362, 0
          %v1369 = vsel %vm1048, %v1364, 0
          %1371 = vmatprep.subr.bf16.mxu0 0
          %1372 = vmatpush1.bf16.msra.mxu0 %v1369
          %1373 = vmatprep.subr.bf16.mxu0 0
          %1374 = vmatpush1.bf16.msra.mxu0 0
          %1375 = vmatprep.subr.bf16.mxu0 0
          %1376 = vmatpush1.bf16.msra.mxu0 0
          %1377 = vmatprep.subr.bf16.mxu0 0
          %1378 = vmatpush1.bf16.msra.mxu0 0
          %1379 = vmatprep.subr.bf16.mxu0 0
          %1380 = vmatpush1.bf16.msra.mxu0 0
          %1381 = vmatprep.subr.bf16.mxu0 0
          %1382 = vmatpush1.bf16.msra.mxu0 0
          %1383 = vmatprep.subr.bf16.mxu0 0
          %1384 = vmatpush1.bf16.msra.mxu0 0
          %1385 = vmatprep.subr.bf16.mxu0 0
          %1386 = vmatpush1.bf16.msra.mxu0 0
          %1387 = vmatprep.subr.bf16.mxu0 0
          %1388 = vmatpush1.bf16.msra.mxu0 0
          %1389 = vmatprep.subr.bf16.mxu0 0
          %1390 = vmatpush1.bf16.msra.mxu0 0
          %1391 = vmatprep.subr.bf16.mxu0 0
          %1392 = vmatpush1.bf16.msra.mxu0 0
          %1393 = vmatprep.subr.bf16.mxu0 0
          %1394 = vmatpush1.bf16.msra.mxu0 0
          %1395 = vmatprep.subr.bf16.mxu0 0
          %1396 = vmatpush1.bf16.msra.mxu0 0
          %1397 = vmatprep.subr.bf16.mxu0 0
          %1398 = vmatpush1.bf16.msra.mxu0 0
          %1399 = vmatprep.subr.bf16.mxu0 0
          %1400 = vmatpush1.bf16.msra.mxu0 0
          %1401 = vmatprep.subr.bf16.mxu0 0
          %1402 = vmatpush1.bf16.msra.mxu0 0
          %1403 = vmatprep.mubr.bf16.mxu0 0
          %1404 = vmatmul.mubr.bf16.gmra.mrb[0].mxu0 %v1366
          %v1405 = vpop.f32.mrb[0].mxu0
          %v1406 = vadd.f32 0.0, %v1405
          %v1407 = vpop.f32.mrb[0].mxu0
          %v1408 = vpop.f32.mrb[0].mxu0
          %v1409 = vpop.f32.mrb[0].mxu0
          %1410 = vdwg.mxu0
          %v1411 = vpack.c.bf16 %v1406, %v1406
          %v1413 = vsel %vm985, %v1411, 0
          %v1416 = vsel %vm1048, %v978, 0
          %1418 = vmatprep.subr.bf16.mxu0 0
          %1419 = vmatpush1.bf16.msra.mxu0 %v1416
          %1420 = vmatprep.subr.bf16.mxu0 0
          %1421 = vmatpush1.bf16.msra.mxu0 0
          %1422 = vmatprep.subr.bf16.mxu0 0
          %1423 = vmatpush1.bf16.msra.mxu0 0
          %1424 = vmatprep.subr.bf16.mxu0 0
          %1425 = vmatpush1.bf16.msra.mxu0 0
          %1426 = vmatprep.subr.bf16.mxu0 0
          %1427 = vmatpush1.bf16.msra.mxu0 0
          %1428 = vmatprep.subr.bf16.mxu0 0
          %1429 = vmatpush1.bf16.msra.mxu0 0
          %1430 = vmatprep.subr.bf16.mxu0 0
          %1431 = vmatpush1.bf16.msra.mxu0 0
          %1432 = vmatprep.subr.bf16.mxu0 0
          %1433 = vmatpush1.bf16.msra.mxu0 0
          %1434 = vmatprep.subr.bf16.mxu0 0
          %1435 = vmatpush1.bf16.msra.mxu0 0
          %1436 = vmatprep.subr.bf16.mxu0 0
          %1437 = vmatpush1.bf16.msra.mxu0 0
          %1438 = vmatprep.subr.bf16.mxu0 0
          %1439 = vmatpush1.bf16.msra.mxu0 0
          %1440 = vmatprep.subr.bf16.mxu0 0
          %1441 = vmatpush1.bf16.msra.mxu0 0
          %1442 = vmatprep.subr.bf16.mxu0 0
          %1443 = vmatpush1.bf16.msra.mxu0 0
          %1444 = vmatprep.subr.bf16.mxu0 0
          %1445 = vmatpush1.bf16.msra.mxu0 0
          %1446 = vmatprep.subr.bf16.mxu0 0
          %1447 = vmatpush1.bf16.msra.mxu0 0
          %1448 = vmatprep.subr.bf16.mxu0 0
          %1449 = vmatpush1.bf16.msra.mxu0 0
          %1450 = vmatprep.mubr.bf16.mxu0 0
          %1451 = vmatmul.mubr.bf16.gmra.mrb[0].mxu0 %v1413
          %v1452 = vpop.f32.mrb[0].mxu0
          %v1453 = vadd.f32 0.0, %v1452
          %v1454 = vpop.f32.mrb[0].mxu0
          %v1455 = vpop.f32.mrb[0].mxu0
          %v1456 = vpop.f32.mrb[0].mxu0
          %1457 = vdwg.mxu0
          %v1458 = vadd.f32 %v1295, %v1453
          %1459 = vrot.lane.b32.xlu0 %v973, 104
          %v1460 = vpop.permute.xlu0 %1459
          %1461 = vrot.lane.b32.xlu0 %v974, 104
          %v1462 = vpop.permute.xlu0 %1461
          %v1464 = vsel %vm985, %v1460, 0
          %v1467 = vsel %vm985, %v1462, 0
          %1469 = vmatprep.subr.bf16.mxu0 0
          %1470 = vmatpush1.bf16.xpose.msra.mxu0 %v1467
          %1471 = vmatprep.subr.bf16.mxu0 0
          %1472 = vmatpush1.bf16.xpose.msra.mxu0 0
          %1473 = vmatprep.subr.bf16.mxu0 0
          %1474 = vmatpush1.bf16.xpose.msra.mxu0 0
          %1475 = vmatprep.subr.bf16.mxu0 0
          %1476 = vmatpush1.bf16.xpose.msra.mxu0 0
          %1477 = vmatprep.subr.bf16.mxu0 0
          %1478 = vmatpush1.bf16.xpose.msra.mxu0 0
          %1479 = vmatprep.subr.bf16.mxu0 0
          %1480 = vmatpush1.bf16.xpose.msra.mxu0 0
          %1481 = vmatprep.subr.bf16.mxu0 0
          %1482 = vmatpush1.bf16.xpose.msra.mxu0 0
          %1483 = vmatprep.subr.bf16.mxu0 0
          %1484 = vmatpush1.bf16.xpose.msra.mxu0 0
          %1485 = vmatprep.subr.bf16.mxu0 0
          %1486 = vmatpush1.bf16.xpose.msra.mxu0 0
          %1487 = vmatprep.subr.bf16.mxu0 0
          %1488 = vmatpush1.bf16.xpose.msra.mxu0 0
          %1489 = vmatprep.subr.bf16.mxu0 0
          %1490 = vmatpush1.bf16.xpose.msra.mxu0 0
          %1491 = vmatprep.subr.bf16.mxu0 0
          %1492 = vmatpush1.bf16.xpose.msra.mxu0 0
          %1493 = vmatprep.subr.bf16.mxu0 0
          %1494 = vmatpush1.bf16.xpose.msra.mxu0 0
          %1495 = vmatprep.subr.bf16.mxu0 0
          %1496 = vmatpush1.bf16.xpose.msra.mxu0 0
          %1497 = vmatprep.subr.bf16.mxu0 0
          %1498 = vmatpush1.bf16.xpose.msra.mxu0 0
          %1499 = vmatprep.subr.bf16.mxu0 0
          %1500 = vmatpush1.bf16.xpose.msra.mxu0 0
          %1501 = vmatprep.mubr.bf16.mxu0 0
          %1502 = vmatmul.mubr.bf16.gmra.mrb[0].mxu0 %v1464
          %v1503 = vpop.f32.mrb[0].mxu0
          %v1504 = vadd.f32 0.0, %v1503
          %v1505 = vpop.f32.mrb[0].mxu0
          %v1506 = vpop.f32.mrb[0].mxu0
          %v1507 = vpop.f32.mrb[0].mxu0
          %1508 = vdwg.mxu0
          %v1509 = vsel %vm984, %v1504, -1e+30
          %v1510 = vsel %vm985, %v1509, -inf
          %1511 = vmax.xlane.f32.xlu0 %v1510
          %v1512 = vpop.xlane.xlu0 %1511
          %v1513 = vsub.f32 %v1509, %v1512
          %v1514 = vmul.f32 %v1513, 1.442695
          %v1515 = vpow.pop %v1514
          %v1516 = vsel %vm985, %v1515, 0.0
          %1517 = vadd.xlane.f32.xlu0 %v1516
          %v1518 = vpop.xlane.xlu0 %1517
          %v1519 = vrcp.pop %v1518
          %v1520 = vmul.f32 %v1515, %v1519
          %v1521 = vpack.c.bf16 %v1520, %v1520
          %1522 = vrot.lane.b32.xlu0 %v975, 104
          %v1523 = vpop.permute.xlu0 %1522
          %v1525 = vsel %vm985, %v1521, 0
          %v1528 = vsel %vm1048, %v1523, 0
          %1530 = vmatprep.subr.bf16.mxu0 0
          %1531 = vmatpush1.bf16.msra.mxu0 %v1528
          %1532 = vmatprep.subr.bf16.mxu0 0
          %1533 = vmatpush1.bf16.msra.mxu0 0
          %1534 = vmatprep.subr.bf16.mxu0 0
          %1535 = vmatpush1.bf16.msra.mxu0 0
          %1536 = vmatprep.subr.bf16.mxu0 0
          %1537 = vmatpush1.bf16.msra.mxu0 0
          %1538 = vmatprep.subr.bf16.mxu0 0
          %1539 = vmatpush1.bf16.msra.mxu0 0
          %1540 = vmatprep.subr.bf16.mxu0 0
          %1541 = vmatpush1.bf16.msra.mxu0 0
          %1542 = vmatprep.subr.bf16.mxu0 0
          %1543 = vmatpush1.bf16.msra.mxu0 0
          %1544 = vmatprep.subr.bf16.mxu0 0
          %1545 = vmatpush1.bf16.msra.mxu0 0
          %1546 = vmatprep.subr.bf16.mxu0 0
          %1547 = vmatpush1.bf16.msra.mxu0 0
          %1548 = vmatprep.subr.bf16.mxu0 0
          %1549 = vmatpush1.bf16.msra.mxu0 0
          %1550 = vmatprep.subr.bf16.mxu0 0
          %1551 = vmatpush1.bf16.msra.mxu0 0
          %1552 = vmatprep.subr.bf16.mxu0 0
          %1553 = vmatpush1.bf16.msra.mxu0 0
          %1554 = vmatprep.subr.bf16.mxu0 0
          %1555 = vmatpush1.bf16.msra.mxu0 0
          %1556 = vmatprep.subr.bf16.mxu0 0
          %1557 = vmatpush1.bf16.msra.mxu0 0
          %1558 = vmatprep.subr.bf16.mxu0 0
          %1559 = vmatpush1.bf16.msra.mxu0 0
          %1560 = vmatprep.subr.bf16.mxu0 0
          %1561 = vmatpush1.bf16.msra.mxu0 0
          %1562 = vmatprep.mubr.bf16.mxu0 0
          %1563 = vmatmul.mubr.bf16.gmra.mrb[0].mxu0 %v1525
          %v1564 = vpop.f32.mrb[0].mxu0
          %v1565 = vadd.f32 0.0, %v1564
          %v1566 = vpop.f32.mrb[0].mxu0
          %v1567 = vpop.f32.mrb[0].mxu0
          %v1568 = vpop.f32.mrb[0].mxu0
          %1569 = vdwg.mxu0
          %v1570 = vpack.c.bf16 %v1565, %v1565
          %v1572 = vsel %vm985, %v1570, 0
          %v1575 = vsel %vm1048, %v979, 0
          %1577 = vmatprep.subr.bf16.mxu0 0
          %1578 = vmatpush1.bf16.msra.mxu0 %v1575
          %1579 = vmatprep.subr.bf16.mxu0 0
          %1580 = vmatpush1.bf16.msra.mxu0 0
          %1581 = vmatprep.subr.bf16.mxu0 0
          %1582 = vmatpush1.bf16.msra.mxu0 0
          %1583 = vmatprep.subr.bf16.mxu0 0
          %1584 = vmatpush1.bf16.msra.mxu0 0
          %1585 = vmatprep.subr.bf16.mxu0 0
          %1586 = vmatpush1.bf16.msra.mxu0 0
          %1587 = vmatprep.subr.bf16.mxu0 0
          %1588 = vmatpush1.bf16.msra.mxu0 0
          %1589 = vmatprep.subr.bf16.mxu0 0
          %1590 = vmatpush1.bf16.msra.mxu0 0
          %1591 = vmatprep.subr.bf16.mxu0 0
          %1592 = vmatpush1.bf16.msra.mxu0 0
          %1593 = vmatprep.subr.bf16.mxu0 0
          %1594 = vmatpush1.bf16.msra.mxu0 0
          %1595 = vmatprep.subr.bf16.mxu0 0
          %1596 = vmatpush1.bf16.msra.mxu0 0
          %1597 = vmatprep.subr.bf16.mxu0 0
          %1598 = vmatpush1.bf16.msra.mxu0 0
          %1599 = vmatprep.subr.bf16.mxu0 0
          %1600 = vmatpush1.bf16.msra.mxu0 0
          %1601 = vmatprep.subr.bf16.mxu0 0
          %1602 = vmatpush1.bf16.msra.mxu0 0
          %1603 = vmatprep.subr.bf16.mxu0 0
          %1604 = vmatpush1.bf16.msra.mxu0 0
          %1605 = vmatprep.subr.bf16.mxu0 0
          %1606 = vmatpush1.bf16.msra.mxu0 0
          %1607 = vmatprep.subr.bf16.mxu0 0
          %1608 = vmatpush1.bf16.msra.mxu0 0
          %1609 = vmatprep.mubr.bf16.mxu0 0
          %1610 = vmatmul.mubr.bf16.gmra.mrb[0].mxu0 %v1572
          %v1611 = vpop.f32.mrb[0].mxu0
          %v1612 = vadd.f32 0.0, %v1611
          %v1613 = vpop.f32.mrb[0].mxu0
          %v1614 = vpop.f32.mrb[0].mxu0
          %v1615 = vpop.f32.mrb[0].mxu0
          %1616 = vdwg.mxu0
          %v1617 = vadd.f32 %v1458, %v1612
          %v1618 = vadd.f32 %v661, %v1617
          %1619 = vst.msk [vmem:[%s605] sm:$0xff] %vm664, %v1618
          %v1620 = vld [vmem:[%s5] sm:$0x1]
          %v1621 = vmul.f32 %v1618, %v1618
          %v1622 = vsel %vm664, %v1621, 0.0
          %1623 = vadd.xlane.f32.xlu0 %v1622
          %v1624 = vpop.xlane.xlu0 %1623
          %v1625 = vmul.f32 %v1624, %v668
          %v1626 = vadd.f32 %v1625, 1e-06
          %v1627 = vrsqrt.pop %v1626
          %v1628 = vmul.f32 %v1618, %v1627
          %v1630 = vlaneseq
          %v1631 = vshrl.u32 %v1630, 7
          %v1632 = vsub.s32 0, %v1631
          %v1633 = vrot.slane %v1620, %v1632
          %v1635 = vmul.f32 %v1628, %v1633
          %v1636 = vpack.c.bf16 %v1635, %v1635
          %vm1637 = vcmask 257024
          %1638 = vst.msk [vmem:[#allocation2] sm:$0xf] %vm1637, %v1636
        $region80: #{tpu_custom_call.1} parent=75 // pred_fallthru
          _
        %s1639 = sshra.s32 %s45, 7
        %s1640 = sand.u32 %s45, 127
        %s1641 = sadd.s32 %s1639, %s44
        %s1642 = smul.u32 %s1641, 128
        %s1643 = sshra.s32 %s45, 7
        %s1644 = sand.u32 %s45, 127
        %s1645 = sadd.s32 %s1642, %s1644
        %s1646 = sld [smem:[#allocation4 + %s1645]]
        %s1647 = sld [smem:[#allocation5 + %s44]]
        %p1648 = scmp.lt.s32.totalorder %s45, %s1647
        // Predicated region
        $region81: #{tpu_custom_call.1} parent=75 // pred_check
          %p1649 = pneg %p1648
        $region82: #{tpu_custom_call.1} parent=75 // pred_check_branch
          %1651 = sbr.rel (%p1649) target = $region84
        $region83: #{tpu_custom_call.1} parent=75 // pred_region
          %v1652 = vld [vmem:[#allocation2] sm:$0xf]
          %v1653 = vld [vmem:[%s626] sm:$0xf]
          %v1654 = vld [vmem:[%s626 + $0x4] sm:$0xf]
          %v1655 = vld [vmem:[%s626 + $0x8] sm:$0xf]
          %v1656 = vld [vmem:[%s626 + $0xc] sm:$0xf]
          %v1661 = vunpack.c.l.b16 %v1653
          %v1662 = vunpack.c.l.b16 %v1654
          %v1663 = vunpack.c.l.b16 %v1655
          %v1664 = vunpack.c.l.b16 %v1656
          %v1665 = vpack.c.b16 %v1662, %v1661
          %v1666 = vpack.c.b16 %v1664, %v1663
          %vm1669 = vcmask 261120
          %v1671 = vsel %vm1669, %v1652, 0
          %1673 = vmatprep.subr.bf16.mxu0 0
          %1674 = vmatpush1.bf16.msra.mxu0 %v1665
          %1675 = vmatprep.subr.bf16.mxu0 0
          %1676 = vmatpush1.bf16.msra.mxu0 %v1666
          %1677 = vmatprep.subr.bf16.mxu0 0
          %1678 = vmatpush1.bf16.msra.mxu0 0
          %1679 = vmatprep.subr.bf16.mxu0 0
          %1680 = vmatpush1.bf16.msra.mxu0 0
          %1681 = vmatprep.subr.bf16.mxu0 0
          %1682 = vmatpush1.bf16.msra.mxu0 0
          %1683 = vmatprep.subr.bf16.mxu0 0
          %1684 = vmatpush1.bf16.msra.mxu0 0
          %1685 = vmatprep.subr.bf16.mxu0 0
          %1686 = vmatpush1.bf16.msra.mxu0 0
          %1687 = vmatprep.subr.bf16.mxu0 0
          %1688 = vmatpush1.bf16.msra.mxu0 0
          %1689 = vmatprep.subr.bf16.mxu0 0
          %1690 = vmatpush1.bf16.msra.mxu0 0
          %1691 = vmatprep.subr.bf16.mxu0 0
          %1692 = vmatpush1.bf16.msra.mxu0 0
          %1693 = vmatprep.subr.bf16.mxu0 0
          %1694 = vmatpush1.bf16.msra.mxu0 0
          %1695 = vmatprep.subr.bf16.mxu0 0
          %1696 = vmatpush1.bf16.msra.mxu0 0
          %1697 = vmatprep.subr.bf16.mxu0 0
          %1698 = vmatpush1.bf16.msra.mxu0 0
          %1699 = vmatprep.subr.bf16.mxu0 0
          %1700 = vmatpush1.bf16.msra.mxu0 0
          %1701 = vmatprep.subr.bf16.mxu0 0
          %1702 = vmatpush1.bf16.msra.mxu0 0
          %1703 = vmatprep.subr.bf16.mxu0 0
          %1704 = vmatpush1.bf16.msra.mxu0 0
          %1705 = vmatprep.mubr.bf16.mxu0 0
          %1706 = vmatmul.mubr.bf16.gmra.mrb[0].mxu0 %v1671
          %v1707 = vpop.f32.mrb[0].mxu0
          %v1708 = vadd.f32 0.0, %v1707
          %v1709 = vpop.f32.mrb[0].mxu0
          %v1710 = vpop.f32.mrb[0].mxu0
          %v1711 = vpop.f32.mrb[0].mxu0
          %1712 = vdwg.mxu0
          %v1713 = vxor.u32 %v1708, 2147483648
          %v1714 = vmul.f32 %v1713, 1.442695
          %v1715 = vpow.pop %v1714
          %v1716 = vadd.f32 %v1715, 1.0
          %v1717 = vrcp.pop %v1716
          %v1718 = vmul.f32 1.0, %v1717
          %v1719 = vmul.f32 %v1708, %v1718
          %v1720 = vld [vmem:[%s613] sm:$0xff]
          %v1721 = vstv %s1646
          %vm1722 = vcmp.eq.s32.totalorder %v1720, %v1721
          %v1723 = vsel %vm1722, 1, 0
          %1724 = vset.pattern.permute.xlu0 0
          %1725 = vperm.xlu0 %1724, %v1723
          %v1726 = vpop.permute.xlu0 %1725
          %vm1727 = vcmp.eq.s32.totalorder %v1726, 1
          %v1728 = vsel %vm1727, %v1719, 0.0
          %v1729 = vpack.c.bf16 %v1728, %v1728
          %v1730 = vld [vmem:[%s605] sm:$0xff]
          %v1731 = vld [vmem:[%s647] sm:$0xf]
          %v1732 = vld [vmem:[%s647 + $0x4] sm:$0xf]
          %v1733 = vld [vmem:[%s647 + $0x8] sm:$0xf]
          %v1734 = vld [vmem:[%s647 + $0xc] sm:$0xf]
          %v1735 = vld [vmem:[%s647 + $0x10] sm:$0xf]
          %v1736 = vld [vmem:[%s647 + $0x14] sm:$0xf]
          %v1737 = vld [vmem:[%s647 + $0x18] sm:$0xf]
          %v1738 = vld [vmem:[%s647 + $0x1c] sm:$0xf]
          %v1739 = vld [vmem:[%s647 + $0x20] sm:$0xf]
          %v1740 = vld [vmem:[%s647 + $0x24] sm:$0xf]
          %v1741 = vld [vmem:[%s647 + $0x28] sm:$0xf]
          %v1742 = vld [vmem:[%s647 + $0x2c] sm:$0xf]
          %v1743 = vld [vmem:[%s647 + $0x30] sm:$0xf]
          %v1744 = vld [vmem:[%s647 + $0x34] sm:$0xf]
          %v1745 = vld [vmem:[%s647 + $0x38] sm:$0xf]
          %v1746 = vld [vmem:[%s647 + $0x3c] sm:$0xf]
          %v1763 = vunpack.c.l.b16 %v1731
          %v1764 = vunpack.c.l.b16 %v1732
          %v1765 = vunpack.c.l.b16 %v1733
          %v1766 = vunpack.c.l.b16 %v1734
          %v1767 = vunpack.c.l.b16 %v1735
          %v1768 = vunpack.c.l.b16 %v1736
          %v1769 = vunpack.c.l.b16 %v1737
          %v1770 = vunpack.c.l.b16 %v1738
          %v1771 = vunpack.c.l.b16 %v1739
          %v1772 = vunpack.c.l.b16 %v1740
          %v1773 = vunpack.c.l.b16 %v1741
          %v1774 = vunpack.c.l.b16 %v1742
          %v1775 = vunpack.c.l.b16 %v1743
          %v1776 = vunpack.c.l.b16 %v1744
          %v1777 = vunpack.c.l.b16 %v1745
          %v1778 = vunpack.c.l.b16 %v1746
          %v1779 = vpack.c.b16 %v1764, %v1763
          %v1780 = vpack.c.b16 %v1766, %v1765
          %v1781 = vpack.c.b16 %v1768, %v1767
          %v1782 = vpack.c.b16 %v1770, %v1769
          %v1783 = vpack.c.b16 %v1772, %v1771
          %v1784 = vpack.c.b16 %v1774, %v1773
          %v1785 = vpack.c.b16 %v1776, %v1775
          %v1786 = vpack.c.b16 %v1778, %v1777
          %1795 = vmatprep.subr.bf16.mxu0 0
          %1796 = vmatpush1.bf16.msra.mxu0 %v1779
          %1797 = vmatprep.subr.bf16.mxu0 0
          %1798 = vmatpush1.bf16.msra.mxu0 %v1780
          %1799 = vmatprep.subr.bf16.mxu0 0
          %1800 = vmatpush1.bf16.msra.mxu0 %v1781
          %1801 = vmatprep.subr.bf16.mxu0 0
          %1802 = vmatpush1.bf16.msra.mxu0 %v1782
          %1803 = vmatprep.subr.bf16.mxu0 0
          %1804 = vmatpush1.bf16.msra.mxu0 %v1783
          %1805 = vmatprep.subr.bf16.mxu0 0
          %1806 = vmatpush1.bf16.msra.mxu0 %v1784
          %1807 = vmatprep.subr.bf16.mxu0 0
          %1808 = vmatpush1.bf16.msra.mxu0 %v1785
          %1809 = vmatprep.subr.bf16.mxu0 0
          %1810 = vmatpush1.bf16.msra.mxu0 %v1786
          %1811 = vmatprep.subr.bf16.mxu0 0
          %1812 = vmatpush1.bf16.msra.mxu0 0
          %1813 = vmatprep.subr.bf16.mxu0 0
          %1814 = vmatpush1.bf16.msra.mxu0 0
          %1815 = vmatprep.subr.bf16.mxu0 0
          %1816 = vmatpush1.bf16.msra.mxu0 0
          %1817 = vmatprep.subr.bf16.mxu0 0
          %1818 = vmatpush1.bf16.msra.mxu0 0
          %1819 = vmatprep.subr.bf16.mxu0 0
          %1820 = vmatpush1.bf16.msra.mxu0 0
          %1821 = vmatprep.subr.bf16.mxu0 0
          %1822 = vmatpush1.bf16.msra.mxu0 0
          %1823 = vmatprep.subr.bf16.mxu0 0
          %1824 = vmatpush1.bf16.msra.mxu0 0
          %1825 = vmatprep.subr.bf16.mxu0 0
          %1826 = vmatpush1.bf16.msra.mxu0 0
          %1827 = vmatprep.mubr.bf16.mxu0 0
          %1828 = vmatmul.mubr.bf16.gmra.mrb[0].mxu0 %v1729
          %v1829 = vpop.f32.mrb[0].mxu0
          %v1830 = vadd.f32 0.0, %v1829
          %v1831 = vpop.f32.mrb[0].mxu0
          %v1832 = vpop.f32.mrb[0].mxu0
          %v1833 = vpop.f32.mrb[0].mxu0
          %1834 = vdwg.mxu0
          %v1835 = vadd.f32 %v1730, %v1830
          %1836 = vst.msk [vmem:[%s605] sm:$0xff] %vm1669, %v1835
        $region84: #{tpu_custom_call.1} parent=75 // pred_fallthru
          _
        %s1837 = sand.u32 %s406, 1
        %s1838 = scalar_lea.sflag [#allocation7], %s1837
        %s1839 = sand.u32 %s406, 1
        %s1840 = smul.addr %s1839, 8
        %s1841 = scalar_lea.vmem [#allocation6], %s1840
        // Predicated region
        $region85: #{tpu_custom_call.1} parent=75 // pred_check
          %p1842 = pneg %p416
        $region86: #{tpu_custom_call.1} parent=75 // pred_check_branch
          %1844 = sbr.rel (%p1842) target = $region88
        $region87: #{tpu_custom_call.1} parent=75 // pred_region
          %s1846 = ssub.s32 128, 128
          %1847 = vsyncadd %s1838, %s1846
          %s1848 = smul.addr %s44, 128
          %s1849 = scalar_lea.hbm %s16, %s1848
          %s1851 = sshll.u32 %s1841, 4
          %s1852 = int_to_ptr.vmem [resolvable:$true] %s1851
          %1854 = dma.vmem_to_hbm [thread:$0]  %s1852, 128, %s1849, %s1838
        $region88: #{tpu_custom_call.1} parent=75 // pred_fallthru
          _
      $region76: #{tpu_custom_call.1} parent=5 // pred_fallthru
        _
      %p1855 = scmp.le.s32.totalorder 2, %s35
      // Predicated region
      $region89: #{tpu_custom_call.1} parent=5 // pred_check
        %p1856 = pneg %p1855
      $region90: #{tpu_custom_call.1} parent=5 // pred_check_branch
        %1858 = sbr.rel (%p1856) target = $region92
      $region91: #{tpu_custom_call.1} parent=5 // pred_region
        %s1859 = ssub.s32 %s35, 2
        // Predicated region
        $region93: #{tpu_custom_call.1} parent=91 // pred_check
          %p1860 = pneg %p422
        $region94: #{tpu_custom_call.1} parent=91 // pred_check_branch
          %1862 = sbr.rel (%p1860) target = $region96
        $region95: #{tpu_custom_call.1} parent=91 // pred_region
          %s1863 = sand.u32 %s407, 1
          %s1864 = scalar_lea.sflag [#allocation7], %s1863
          %s1865 = sand.u32 %s407, 1
          %s1866 = smul.addr %s1865, 8
          %s1867 = scalar_lea.vmem [#allocation6], %s1866
          %1868 = dma.done %s1864, 128
        $region96: #{tpu_custom_call.1} parent=91 // pred_fallthru
          _
      $region92: #{tpu_custom_call.1} parent=5 // pred_fallthru
        _
    $region6: #{tpu_custom_call.1} parent=1 // loop_footer
      %s39 = sadd.s32 1, %s35
    $region7: #{tpu_custom_call.1} parent=1 // loop_footer_branch
      %34 = sbr.rel target = $region3
    $region8: #{tpu_custom_call.1} parent=1 // loop_exit
      _
    %1869 = vsyncpa [#allocation7], 1
    %s1870 = scalar_lea.sflag [#allocation7], 1
    %1871 = vsyncpa %s1870, 1

</llo_original>
